<compile_context>
chip_gen: v6e
topology: v6e:2x2x1
jax: 0.10.0
libtpu: 0.0.40
codegen_flags: <defaults>
</compile_context>

<pallas_src>
import jax
import jax.numpy as jnp
import numpy as np
from jax.experimental import pallas as pl
from jax.experimental.pallas import tpu as pltpu

IMG_SIZE = 64
IN_FEATS = IMG_SIZE * IMG_SIZE   # 4096
H1 = 128
H2 = 64
H2_PAD = 128                     # fc2 output padded 64 -> 128 (lane-dense)
OUT_PAD = 128                    # fc3 weight padded 1 -> 128 (MXU lane width)
DEFAULT_TILE_B = 512             # f32 x tile: 8 MiB, double-buffered 16 MiB


def _round_up(n, m):
    return ((n + m - 1) // m) * m


def mlp_kernel(x_ref, w1_ref, b1_ref, w2_ref, b2_ref, w3_ref, b3_ref, o_ref):
    # x streams in as f32; cast to bf16 in-kernel (VPU) just before the MXU.
    x = x_ref[...].astype(jnp.bfloat16)
    # fc1 + ReLU (bf16 x bf16 -> f32 accumulate on the MXU)
    h1 = jnp.dot(x, w1_ref[...], preferred_element_type=jnp.float32)
    h1 = jnp.maximum(h1 + b1_ref[...], 0.0)
    # fc2 + ReLU (H2 zero-padded to 128 lanes; padded lanes stay exactly 0)
    h2 = jnp.dot(h1.astype(jnp.bfloat16), w2_ref[...],
                 preferred_element_type=jnp.float32)
    h2 = jnp.maximum(h2 + b2_ref[...], 0.0)
    # fc3 + sigmoid; only lane 0 is real -> slice before the store so the
    # output array is a true (B, 1) column (128x smaller writeback).
    z = jnp.dot(h2.astype(jnp.bfloat16), w3_ref[...],
                preferred_element_type=jnp.float32) + b3_ref[...]
    o_ref[...] = jax.nn.sigmoid(z[:, :1])


def prepare_params(params):
    """One-time padding + bf16 cast of the weights (hoisted out of the hot path)."""
    w1, b1, w2, b2, w3, b3 = params

    w1p = w1.astype(jnp.bfloat16)                                  # (4096, 128)
    b1p = b1.reshape(1, H1).astype(jnp.float32)                    # (1, 128)

    w2p = jnp.zeros((H1, H2_PAD), jnp.bfloat16).at[:, :H2].set(
        w2.astype(jnp.bfloat16))                                   # (128, 128)
    b2p = jnp.zeros((1, H2_PAD), jnp.float32).at[:, :H2].set(
        b2.reshape(1, H2))                                         # (1, 128)

    w3p = jnp.zeros((H2_PAD, OUT_PAD), jnp.bfloat16).at[:H2, :1].set(
        w3.astype(jnp.bfloat16))                                   # (128, 128)
    b3p = jnp.zeros((1, OUT_PAD), jnp.float32).at[:, :1].set(
        b3.reshape(1, 1))                                          # (1, 128)

    return (w1p, b1p, w2p, b2p, w3p, b3p)


def model1_forward(x_nchw, prepped_params, tile_b=DEFAULT_TILE_B):
    w1, b1, w2, b2, w3, b3 = prepped_params
    B = x_nchw.shape[0]

    # nn.Flatten on NCHW (C=1) == row-major flatten; free reshape, no dtype
    # cast and no padding copy here -- f32 x goes straight into the kernel.
    x2d = x_nchw.reshape(B, IN_FEATS)

    # Batch tile: at most tile_b rows, rounded to a sublane multiple (8).
    tile = min(tile_b, _round_up(B, 8))
    # If everything fits in one tile but there's enough work, split in two so
    # the ("parallel",) axis can feed both TensorCores on v7x.
    if (B + tile - 1) // tile == 1 and B >= 16:
        tile = _round_up((B + 1) // 2, 8)
    num_tiles = (B + tile - 1) // tile   # last block may be partial (OOB rows
                                         # are read as garbage and their writes
                                         # are dropped; rows are independent).

    weight_bytes = (IN_FEATS * H1 + H1 * H2_PAD + H2_PAD * OUT_PAD) * 2 \
        + (H1 + H2_PAD + OUT_PAD) * 4
    cost = pl.CostEstimate(
        flops=2 * B * (IN_FEATS * H1 + H1 * H2_PAD + H2_PAD * OUT_PAD),
        transcendentals=B,
        bytes_accessed=B * IN_FEATS * 4 + weight_bytes + B * 4,
    )

    out = pl.pallas_call(
        mlp_kernel,
        out_shape=jax.ShapeDtypeStruct((B, 1), jnp.float32),
        grid=(num_tiles,),
        in_specs=[
            # x streams tile-by-tile (double-buffered by the Pallas pipeline).
            pl.BlockSpec((tile, IN_FEATS), lambda i: (i, 0)),
            # Weights/biases: constant index_map -> DMA'd once, stay resident.
            pl.BlockSpec((IN_FEATS, H1), lambda i: (0, 0)),
            pl.BlockSpec((1, H1), lambda i: (0, 0)),
            pl.BlockSpec((H1, H2_PAD), lambda i: (0, 0)),
            pl.BlockSpec((1, H2_PAD), lambda i: (0, 0)),
            pl.BlockSpec((H2_PAD, OUT_PAD), lambda i: (0, 0)),
            pl.BlockSpec((1, OUT_PAD), lambda i: (0, 0)),
        ],
        out_specs=pl.BlockSpec((tile, 1), lambda i: (i, 0)),
        compiler_params=pltpu.CompilerParams(
            dimension_semantics=("parallel",),
            vmem_limit_bytes=32 * 1024 * 1024,
        ),
        cost_estimate=cost,
    )(x2d, w1, b1, w2, b2, w3, b3)

    return out


def init_params(key):
    """Deterministic init matching nn.Linear's default U(-1/sqrt(fan_in), 1/sqrt(fan_in))."""
    ks = jax.random.split(key, 6)

    def uni(k, shape, fan_in):
        bound = 1.0 / np.sqrt(fan_in)
        return jax.random.uniform(k, shape, jnp.float32, -bound, bound)

    w1 = uni(ks[0], (IN_FEATS, H1), IN_FEATS)   # stored as (in, out) == W^T
    b1 = uni(ks[1], (H1,), IN_FEATS)
    w2 = uni(ks[2], (H1, H2), H1)
    b2 = uni(ks[3], (H2,), H1)
    w3 = uni(ks[4], (H2, 1), H2)
    b3 = uni(ks[5], (1,), H2)
    return (w1, b1, w2, b2, w3, b3)


def reference_forward(x_nchw, params):
    """Pure-JAX f32 reference for correctness check."""
    w1, b1, w2, b2, w3, b3 = params
    x = x_nchw.reshape(x_nchw.shape[0], -1)
    h1 = jnp.maximum(x @ w1 + b1, 0.0)
    h2 = jnp.maximum(h1 @ w2 + b2, 0.0)
    return jax.nn.sigmoid(h2 @ w3 + b3)


if __name__ == "__main__":
    key = jax.random.PRNGKey(0)
    k_x, k_p = jax.random.split(key)

    B = 8
    x = jax.random.normal(k_x, (B, 1, IMG_SIZE, IMG_SIZE), jnp.float32)  # NCHW
    params = init_params(k_p)
    prepped = prepare_params(params)   # padding + bf16 casts done once

    out = model1_forward(x, prepped)
    out = jax.block_until_ready(out)

    ref = reference_forward(x, params)
    assert out.shape == (B, 1), out.shape
    # bf16 matmul operands (f32 accumulation) -> relaxed tolerance vs f32 ref.
    np.testing.assert_allclose(np.asarray(out), np.asarray(ref),
                               rtol=2e-2, atol=2e-2)

    print("KERNEL_OK")
</pallas_src>

<mosaic_0001>
module attributes {stable_mosaic.version = 11 : i64} {
  func.func @mlp_kernel(%arg0: i32, %arg1: memref<8x4096xf32, #tpu.memory_space<vmem>>, %arg2: memref<4096x128xbf16, #tpu.memory_space<vmem>>, %arg3: memref<1x128xf32, #tpu.memory_space<vmem>>, %arg4: memref<128x128xbf16, #tpu.memory_space<vmem>>, %arg5: memref<1x128xf32, #tpu.memory_space<vmem>>, %arg6: memref<128x128xbf16, #tpu.memory_space<vmem>>, %arg7: memref<1x128xf32, #tpu.memory_space<vmem>>, %arg8: memref<8x1xf32, #tpu.memory_space<vmem>>) attributes {dimension_semantics = [#tpu.dimension_semantics<parallel>], iteration_bounds = array<i64: 1>, scalar_prefetch = 0 : i64, scratch_operands = 0 : i64, tpu.core_type = #tpu.core_type<tc>, window_params = [{transform_indices = @transform_0, window_bounds = array<i64: 8, 4096>}, {pipeline_mode = #tpu.pipeline_mode<synchronous>, transform_indices = @transform_1, window_bounds = array<i64: 4096, 128>}, {pipeline_mode = #tpu.pipeline_mode<synchronous>, transform_indices = @transform_2, window_bounds = array<i64: 1, 128>}, {pipeline_mode = #tpu.pipeline_mode<synchronous>, transform_indices = @transform_3, window_bounds = array<i64: 128, 128>}, {pipeline_mode = #tpu.pipeline_mode<synchronous>, transform_indices = @transform_4, window_bounds = array<i64: 1, 128>}, {pipeline_mode = #tpu.pipeline_mode<synchronous>, transform_indices = @transform_5, window_bounds = array<i64: 128, 128>}, {pipeline_mode = #tpu.pipeline_mode<synchronous>, transform_indices = @transform_6, window_bounds = array<i64: 1, 128>}, {transform_indices = @transform_7, window_bounds = array<i64: 8, 1>}]} {
    %c0 = arith.constant 0 : index
    %c0_0 = arith.constant 0 : index
    %0 = vector.load %arg1[%c0, %c0_0] : memref<8x4096xf32, #tpu.memory_space<vmem>>, vector<8x4096xf32>
    %1 = arith.truncf %0 : vector<8x4096xf32> to vector<8x4096xbf16>
    %c0_1 = arith.constant 0 : index
    %c0_2 = arith.constant 0 : index
    %2 = vector.load %arg2[%c0_1, %c0_2] : memref<4096x128xbf16, #tpu.memory_space<vmem>>, vector<4096x128xbf16>
    %cst = arith.constant dense<0.000000e+00> : vector<8x128xf32>
    %3 = tpu.matmul %1, %2, %cst {dimension_numbers = #tpu.dot_dimension_numbers<[1], [0], [0], [1], [0, 0, 1, 1], [], []>} : vector<8x4096xbf16>, vector<4096x128xbf16>, vector<8x128xf32> -> vector<8x128xf32>
    %c0_3 = arith.constant 0 : index
    %c0_4 = arith.constant 0 : index
    %4 = vector.load %arg3[%c0_3, %c0_4] : memref<1x128xf32, #tpu.memory_space<vmem>>, vector<1x128xf32>
    %5 = vector.broadcast %4 : vector<1x128xf32> to vector<8x128xf32>
    %6 = arith.addf %3, %5 : vector<8x128xf32>
    %cst_5 = arith.constant 0.000000e+00 : f32
    %7 = vector.broadcast %cst_5 : f32 to vector<8x128xf32>
    %8 = arith.maximumf %6, %7 : vector<8x128xf32>
    %9 = arith.truncf %8 : vector<8x128xf32> to vector<8x128xbf16>
    %c0_6 = arith.constant 0 : index
    %c0_7 = arith.constant 0 : index
    %10 = vector.load %arg4[%c0_6, %c0_7] : memref<128x128xbf16, #tpu.memory_space<vmem>>, vector<128x128xbf16>
    %cst_8 = arith.constant dense<0.000000e+00> : vector<8x128xf32>
    %11 = tpu.matmul %9, %10, %cst_8 {dimension_numbers = #tpu.dot_dimension_numbers<[1], [0], [0], [1], [0, 0, 1, 1], [], []>} : vector<8x128xbf16>, vector<128x128xbf16>, vector<8x128xf32> -> vector<8x128xf32>
    %c0_9 = arith.constant 0 : index
    %c0_10 = arith.constant 0 : index
    %12 = vector.load %arg5[%c0_9, %c0_10] : memref<1x128xf32, #tpu.memory_space<vmem>>, vector<1x128xf32>
    %13 = vector.broadcast %12 : vector<1x128xf32> to vector<8x128xf32>
    %14 = arith.addf %11, %13 : vector<8x128xf32>
    %cst_11 = arith.constant 0.000000e+00 : f32
    %15 = vector.broadcast %cst_11 : f32 to vector<8x128xf32>
    %16 = arith.maximumf %14, %15 : vector<8x128xf32>
    %17 = arith.truncf %16 : vector<8x128xf32> to vector<8x128xbf16>
    %c0_12 = arith.constant 0 : index
    %c0_13 = arith.constant 0 : index
    %18 = vector.load %arg6[%c0_12, %c0_13] : memref<128x128xbf16, #tpu.memory_space<vmem>>, vector<128x128xbf16>
    %cst_14 = arith.constant dense<0.000000e+00> : vector<8x128xf32>
    %19 = tpu.matmul %17, %18, %cst_14 {dimension_numbers = #tpu.dot_dimension_numbers<[1], [0], [0], [1], [0, 0, 1, 1], [], []>} : vector<8x128xbf16>, vector<128x128xbf16>, vector<8x128xf32> -> vector<8x128xf32>
    %c0_15 = arith.constant 0 : index
    %c0_16 = arith.constant 0 : index
    %20 = vector.load %arg7[%c0_15, %c0_16] : memref<1x128xf32, #tpu.memory_space<vmem>>, vector<1x128xf32>
    %21 = vector.broadcast %20 : vector<1x128xf32> to vector<8x128xf32>
    %22 = arith.addf %19, %21 : vector<8x128xf32>
    %23 = vector.extract_strided_slice %22 {offsets = [0, 0], sizes = [8, 1], strides = [1, 1]} : vector<8x128xf32> to vector<8x1xf32>
    %24 = arith.negf %23 : vector<8x1xf32>
    %25 = math.exp %24 : vector<8x1xf32>
    %cst_17 = arith.constant 1.000000e+00 : f32
    %26 = vector.broadcast %cst_17 : f32 to vector<8x1xf32>
    %27 = arith.addf %26, %25 : vector<8x1xf32>
    %28 = arith.divf %26, %27 : vector<8x1xf32>
    %c0_18 = arith.constant 0 : index
    %c0_19 = arith.constant 0 : index
    %29 = vector.load %arg8[%c0_18, %c0_19] : memref<8x1xf32, #tpu.memory_space<vmem>>, vector<8x1xf32>
    tpu.vector_store %arg8[%c0_18, %c0_19], %28 {strides = array<i32>} : memref<8x1xf32, #tpu.memory_space<vmem>>, vector<8x1xf32>,
    return
  }
  func.func @transform_0(%arg0: i32) -> (i32, i32) {
    %c0_i32 = arith.constant 0 : i32
    %c0_i32_0 = arith.constant 0 : i32
    return %arg0, %c0_i32 : i32, i32
  }
  func.func @transform_1(%arg0: i32) -> (i32, i32) {
    %c0_i32 = arith.constant 0 : i32
    %c0_i32_0 = arith.constant 0 : i32
    %c0_i32_1 = arith.constant 0 : i32
    return %c0_i32, %c0_i32_0 : i32, i32
  }
  func.func @transform_2(%arg0: i32) -> (i32, i32) {
    %c0_i32 = arith.constant 0 : i32
    %c0_i32_0 = arith.constant 0 : i32
    %c0_i32_1 = arith.constant 0 : i32
    return %c0_i32, %c0_i32_0 : i32, i32
  }
  func.func @transform_3(%arg0: i32) -> (i32, i32) {
    %c0_i32 = arith.constant 0 : i32
    %c0_i32_0 = arith.constant 0 : i32
    %c0_i32_1 = arith.constant 0 : i32
    return %c0_i32, %c0_i32_0 : i32, i32
  }
  func.func @transform_4(%arg0: i32) -> (i32, i32) {
    %c0_i32 = arith.constant 0 : i32
    %c0_i32_0 = arith.constant 0 : i32
    %c0_i32_1 = arith.constant 0 : i32
    return %c0_i32, %c0_i32_0 : i32, i32
  }
  func.func @transform_5(%arg0: i32) -> (i32, i32) {
    %c0_i32 = arith.constant 0 : i32
    %c0_i32_0 = arith.constant 0 : i32
    %c0_i32_1 = arith.constant 0 : i32
    return %c0_i32, %c0_i32_0 : i32, i32
  }
  func.func @transform_6(%arg0: i32) -> (i32, i32) {
    %c0_i32 = arith.constant 0 : i32
    %c0_i32_0 = arith.constant 0 : i32
    %c0_i32_1 = arith.constant 0 : i32
    return %c0_i32, %c0_i32_0 : i32, i32
  }
  func.func @transform_7(%arg0: i32) -> (i32, i32) {
    %c0_i32 = arith.constant 0 : i32
    %c0_i32_0 = arith.constant 0 : i32
    return %arg0, %c0_i32 : i32, i32
  }
}

</mosaic_0001>

<llo_original>
// kernel: tpu_custom_call.1
$region0: #{tpu_custom_call.1}
  #allocation0 [shape = 'u32[]', space=smem, size = 0x4, offset = 0x4, fixed_abs, tag = 'smem constant byte address 0x4 - core index']
  #allocation1 [shape = 'u32[144,128]{1,0:T(1,128)}', space=vmem, size = 0x12000, scoped, tag = 'internal scratch']
  %s0 = inlined_call_operand.hbm [shape: f32[8,4096], index: 0, kind: input, shape index: {}]
  %s1 = inlined_call_operand.hbm [shape: bf16[4096,128], index: 1, kind: input, shape index: {}]
  %s2 = inlined_call_operand.vmem [shape: f32[1,128], index: 2, kind: input, shape index: {}]
  %s3 = inlined_call_operand.hbm [shape: bf16[128,128], index: 3, kind: input, shape index: {}]
  %s4 = inlined_call_operand.vmem [shape: f32[1,128], index: 4, kind: input, shape index: {}]
  %s5 = inlined_call_operand.hbm [shape: bf16[128,128], index: 5, kind: input, shape index: {}]
  %s6 = inlined_call_operand.vmem [shape: f32[1,128], index: 6, kind: input, shape index: {}]
  %s7 = inlined_call_operand.vmem [shape: f32[8,1], index: 7, kind: output, shape index: {}]
  %s8 = sld [smem:[#allocation0]]
  $region54: #{tpu_custom_call.1} parent=0
    _
  %s10 = ssub.s32 1, %s8
  %s11 = scalar_select 0, %s10, %s8
  $region1: #{tpu_custom_call.1} parent=0
    #allocation2 [shape = 'u8[131072]{0}', space=vmem, size = 0x20000, scoped, tag = 'input window, operand 0, single buffered']
    #allocation3 [shape = 's32[1]{0}', space=sflag, size = 0x4, scoped, tag = 'scoped memory for tpu_custom_call.1']
    #allocation4 [shape = 'u8[1048576]{0}', space=vmem, size = 0x100000, scoped, tag = 'input window, operand 1, single buffered']
    #allocation5 [shape = 's32[1]{0}', space=sflag, size = 0x4, scoped, tag = 'scoped memory for tpu_custom_call.1']
    #allocation6 [shape = 'u8[32768]{0}', space=vmem, size = 0x8000, scoped, tag = 'input window, operand 3, single buffered']
    #allocation7 [shape = 'u8[32768]{0}', space=vmem, size = 0x8000, scoped, tag = 'input window, operand 5, single buffered']
    #allocation8 [shape = 's32[1]{0}', space=sflag, size = 0x4, scoped, tag = 'scoped memory for tpu_custom_call.1']
    %12 = vsyncpa [#allocation3], 0
    %13 = vsyncpa [#allocation5], 0
    %14 = vsyncpa [#allocation8], 0
    // Predicated region
    $region2: #{tpu_custom_call.1} parent=1 // pred_check
      _
    $region3: #{tpu_custom_call.1} parent=1 // pred_check_branch
      %16 = sbr.rel (0) target = $region5
    $region4: #{tpu_custom_call.1} parent=1 // pred_region
      %s18 = ssub.s32 4096, 4096
      %19 = vsyncadd [#allocation3], %s18
      %s21 = sshll.u32 [#allocation2], 4
      %s22 = int_to_ptr.vmem [resolvable:$true] %s21
      %24 = dma.hbm_to_vmem [thread:$0]  %s0, 4096, %s22, [#allocation3]
    $region5: #{tpu_custom_call.1} parent=1 // pred_fallthru
      _
    // Predicated region
    $region6: #{tpu_custom_call.1} parent=1 // pred_check
      _
    $region7: #{tpu_custom_call.1} parent=1 // pred_check_branch
      %26 = sbr.rel (0) target = $region9
    $region8: #{tpu_custom_call.1} parent=1 // pred_region
      %s28 = ssub.s32 32768, 32768
      %29 = vsyncadd [#allocation5], %s28
      %s30 = sshll.u32 [#allocation4], 4
      %s31 = int_to_ptr.vmem [resolvable:$true] %s30
      %36 = dma.hbm_to_vmem [thread:$0]  %s1, 32768, %s31, [#allocation5], 64, 64, 4
    $region9: #{tpu_custom_call.1} parent=1 // pred_fallthru
      _
    // Predicated region
    $region10: #{tpu_custom_call.1} parent=1 // pred_check
      _
    $region11: #{tpu_custom_call.1} parent=1 // pred_check_branch
      %38 = sbr.rel (0) target = $region13
    $region12: #{tpu_custom_call.1} parent=1 // pred_region
      _
    $region13: #{tpu_custom_call.1} parent=1 // pred_fallthru
      _
    // Predicated region
    $region14: #{tpu_custom_call.1} parent=1 // pred_check
      _
    $region15: #{tpu_custom_call.1} parent=1 // pred_check_branch
      %40 = sbr.rel (0) target = $region17
    $region16: #{tpu_custom_call.1} parent=1 // pred_region
      %s42 = ssub.s32 1024, 1024
      %43 = vsyncadd [#allocation5], %s42
      %s44 = sshll.u32 [#allocation6], 4
      %s45 = int_to_ptr.vmem [resolvable:$true] %s44
      %50 = dma.hbm_to_vmem [thread:$0]  %s3, 1024, %s45, [#allocation5], 64, 64, 4
    $region17: #{tpu_custom_call.1} parent=1 // pred_fallthru
      _
    // Predicated region
    $region18: #{tpu_custom_call.1} parent=1 // pred_check
      _
    $region19: #{tpu_custom_call.1} parent=1 // pred_check_branch
      %52 = sbr.rel (0) target = $region21
    $region20: #{tpu_custom_call.1} parent=1 // pred_region
      _
    $region21: #{tpu_custom_call.1} parent=1 // pred_fallthru
      _
    // Predicated region
    $region22: #{tpu_custom_call.1} parent=1 // pred_check
      _
    $region23: #{tpu_custom_call.1} parent=1 // pred_check_branch
      %54 = sbr.rel (0) target = $region25
    $region24: #{tpu_custom_call.1} parent=1 // pred_region
      %s56 = ssub.s32 1024, 1024
      %57 = vsyncadd [#allocation8], %s56
      %s58 = sshll.u32 [#allocation7], 4
      %s59 = int_to_ptr.vmem [resolvable:$true] %s58
      %64 = dma.hbm_to_vmem [thread:$0]  %s5, 1024, %s59, [#allocation8], 64, 64, 4
    $region25: #{tpu_custom_call.1} parent=1 // pred_fallthru
      _
    // Predicated region
    $region26: #{tpu_custom_call.1} parent=1 // pred_check
      _
    $region27: #{tpu_custom_call.1} parent=1 // pred_check_branch
      %66 = sbr.rel (0) target = $region29
    $region28: #{tpu_custom_call.1} parent=1 // pred_region
      _
    $region29: #{tpu_custom_call.1} parent=1 // pred_fallthru
      _
    // Predicated region
    $region30: #{tpu_custom_call.1} parent=1 // pred_check
      _
    $region31: #{tpu_custom_call.1} parent=1 // pred_check_branch
      %68 = sbr.rel (0) target = $region33
    $region32: #{tpu_custom_call.1} parent=1 // pred_region
      %69 = dma.done [#allocation3], 4096
    $region33: #{tpu_custom_call.1} parent=1 // pred_fallthru
      _
    // Predicated region
    $region34: #{tpu_custom_call.1} parent=1 // pred_check
      _
    $region35: #{tpu_custom_call.1} parent=1 // pred_check_branch
      %71 = sbr.rel (0) target = $region37
    $region36: #{tpu_custom_call.1} parent=1 // pred_region
      %72 = dma.done [#allocation5], 32768
    $region37: #{tpu_custom_call.1} parent=1 // pred_fallthru
      _
    // Predicated region
    $region38: #{tpu_custom_call.1} parent=1 // pred_check
      _
    $region39: #{tpu_custom_call.1} parent=1 // pred_check_branch
      %74 = sbr.rel (0) target = $region41
    $region40: #{tpu_custom_call.1} parent=1 // pred_region
      %75 = dma.done [#allocation5], 1024
    $region41: #{tpu_custom_call.1} parent=1 // pred_fallthru
      _
    // Predicated region
    $region42: #{tpu_custom_call.1} parent=1 // pred_check
      _
    $region43: #{tpu_custom_call.1} parent=1 // pred_check_branch
      %77 = sbr.rel (0) target = $region45
    $region44: #{tpu_custom_call.1} parent=1 // pred_region
      %78 = dma.done [#allocation8], 1024
    $region45: #{tpu_custom_call.1} parent=1 // pred_fallthru
      _
    %v80 = vld [vmem:[#allocation2] sm:$0xff]
    %v81 = vld [vmem:[#allocation2 + $0x8] sm:$0xff]
    %v82 = vld [vmem:[#allocation2 + $0x10] sm:$0xff]
    %v83 = vld [vmem:[#allocation2 + $0x18] sm:$0xff]
    %v84 = vld [vmem:[#allocation2 + $0x20] sm:$0xff]
    %v85 = vld [vmem:[#allocation2 + $0x28] sm:$0xff]
    %v86 = vld [vmem:[#allocation2 + $0x30] sm:$0xff]
    %v87 = vld [vmem:[#allocation2 + $0x38] sm:$0xff]
    %v88 = vld [vmem:[#allocation2 + $0x40] sm:$0xff]
    %v89 = vld [vmem:[#allocation2 + $0x48] sm:$0xff]
    %v90 = vld [vmem:[#allocation2 + $0x50] sm:$0xff]
    %v91 = vld [vmem:[#allocation2 + $0x58] sm:$0xff]
    %v92 = vld [vmem:[#allocation2 + $0x60] sm:$0xff]
    %v93 = vld [vmem:[#allocation2 + $0x68] sm:$0xff]
    %v94 = vld [vmem:[#allocation2 + $0x70] sm:$0xff]
    %v95 = vld [vmem:[#allocation2 + $0x78] sm:$0xff]
    %v96 = vld [vmem:[#allocation2 + $0x80] sm:$0xff]
    %v97 = vld [vmem:[#allocation2 + $0x88] sm:$0xff]
    %v98 = vld [vmem:[#allocation2 + $0x90] sm:$0xff]
    %v99 = vld [vmem:[#allocation2 + $0x98] sm:$0xff]
    %v100 = vld [vmem:[#allocation2 + $0xa0] sm:$0xff]
    %v101 = vld [vmem:[#allocation2 + $0xa8] sm:$0xff]
    %v102 = vld [vmem:[#allocation2 + $0xb0] sm:$0xff]
    %v103 = vld [vmem:[#allocation2 + $0xb8] sm:$0xff]
    %v104 = vld [vmem:[#allocation2 + $0xc0] sm:$0xff]
    %v105 = vld [vmem:[#allocation2 + $0xc8] sm:$0xff]
    %v106 = vld [vmem:[#allocation2 + $0xd0] sm:$0xff]
    %v107 = vld [vmem:[#allocation2 + $0xd8] sm:$0xff]
    %v108 = vld [vmem:[#allocation2 + $0xe0] sm:$0xff]
    %v109 = vld [vmem:[#allocation2 + $0xe8] sm:$0xff]
    %v110 = vld [vmem:[#allocation2 + $0xf0] sm:$0xff]
    %v111 = vld [vmem:[#allocation2 + $0xf8] sm:$0xff]
    %v112 = vpack.c.bf16 %v80, %v80
    %v113 = vpack.c.bf16 %v81, %v81
    %v114 = vpack.c.bf16 %v82, %v82
    %v115 = vpack.c.bf16 %v83, %v83
    %v116 = vpack.c.bf16 %v84, %v84
    %v117 = vpack.c.bf16 %v85, %v85
    %v118 = vpack.c.bf16 %v86, %v86
    %v119 = vpack.c.bf16 %v87, %v87
    %v120 = vpack.c.bf16 %v88, %v88
    %v121 = vpack.c.bf16 %v89, %v89
    %v122 = vpack.c.bf16 %v90, %v90
    %v123 = vpack.c.bf16 %v91, %v91
    %v124 = vpack.c.bf16 %v92, %v92
    %v125 = vpack.c.bf16 %v93, %v93
    %v126 = vpack.c.bf16 %v94, %v94
    %v127 = vpack.c.bf16 %v95, %v95
    %v128 = vpack.c.bf16 %v96, %v96
    %v129 = vpack.c.bf16 %v97, %v97
    %v130 = vpack.c.bf16 %v98, %v98
    %v131 = vpack.c.bf16 %v99, %v99
    %v132 = vpack.c.bf16 %v100, %v100
    %v133 = vpack.c.bf16 %v101, %v101
    %v134 = vpack.c.bf16 %v102, %v102
    %v135 = vpack.c.bf16 %v103, %v103
    %v136 = vpack.c.bf16 %v104, %v104
    %v137 = vpack.c.bf16 %v105, %v105
    %v138 = vpack.c.bf16 %v106, %v106
    %v139 = vpack.c.bf16 %v107, %v107
    %v140 = vpack.c.bf16 %v108, %v108
    %v141 = vpack.c.bf16 %v109, %v109
    %v142 = vpack.c.bf16 %v110, %v110
    %v143 = vpack.c.bf16 %v111, %v111
    %v144 = vld [vmem:[#allocation4] sm:$0xf]
    %v145 = vld [vmem:[#allocation4 + $0x4] sm:$0xf]
    %v146 = vld [vmem:[#allocation4 + $0x8] sm:$0xf]
    %v147 = vld [vmem:[#allocation4 + $0xc] sm:$0xf]
    %v148 = vld [vmem:[#allocation4 + $0x10] sm:$0xf]
    %v149 = vld [vmem:[#allocation4 + $0x14] sm:$0xf]
    %v150 = vld [vmem:[#allocation4 + $0x18] sm:$0xf]
    %v151 = vld [vmem:[#allocation4 + $0x1c] sm:$0xf]
    %v152 = vld [vmem:[#allocation4 + $0x20] sm:$0xf]
    %v153 = vld [vmem:[#allocation4 + $0x24] sm:$0xf]
    %v154 = vld [vmem:[#allocation4 + $0x28] sm:$0xf]
    %v155 = vld [vmem:[#allocation4 + $0x2c] sm:$0xf]
    %v156 = vld [vmem:[#allocation4 + $0x30] sm:$0xf]
    %v157 = vld [vmem:[#allocation4 + $0x34] sm:$0xf]
    %v158 = vld [vmem:[#allocation4 + $0x38] sm:$0xf]
    %v159 = vld [vmem:[#allocation4 + $0x3c] sm:$0xf]
    %v160 = vld [vmem:[#allocation4 + $0x40] sm:$0xf]
    %v161 = vld [vmem:[#allocation4 + $0x44] sm:$0xf]
    %v162 = vld [vmem:[#allocation4 + $0x48] sm:$0xf]
    %v163 = vld [vmem:[#allocation4 + $0x4c] sm:$0xf]
    %v164 = vld [vmem:[#allocation4 + $0x50] sm:$0xf]
    %v165 = vld [vmem:[#allocation4 + $0x54] sm:$0xf]
    %v166 = vld [vmem:[#allocation4 + $0x58] sm:$0xf]
    %v167 = vld [vmem:[#allocation4 + $0x5c] sm:$0xf]
    %v168 = vld [vmem:[#allocation4 + $0x60] sm:$0xf]
    %v169 = vld [vmem:[#allocation4 + $0x64] sm:$0xf]
    %v170 = vld [vmem:[#allocation4 + $0x68] sm:$0xf]
    %v171 = vld [vmem:[#allocation4 + $0x6c] sm:$0xf]
    %v172 = vld [vmem:[#allocation4 + $0x70] sm:$0xf]
    %v173 = vld [vmem:[#allocation4 + $0x74] sm:$0xf]
    %v174 = vld [vmem:[#allocation4 + $0x78] sm:$0xf]
    %v175 = vld [vmem:[#allocation4 + $0x7c] sm:$0xf]
    %v176 = vld [vmem:[#allocation4 + $0x80] sm:$0xf]
    %v177 = vld [vmem:[#allocation4 + $0x84] sm:$0xf]
    %v178 = vld [vmem:[#allocation4 + $0x88] sm:$0xf]
    %v179 = vld [vmem:[#allocation4 + $0x8c] sm:$0xf]
    %v180 = vld [vmem:[#allocation4 + $0x90] sm:$0xf]
    %v181 = vld [vmem:[#allocation4 + $0x94] sm:$0xf]
    %v182 = vld [vmem:[#allocation4 + $0x98] sm:$0xf]
    %v183 = vld [vmem:[#allocation4 + $0x9c] sm:$0xf]
    %v184 = vld [vmem:[#allocation4 + $0xa0] sm:$0xf]
    %v185 = vld [vmem:[#allocation4 + $0xa4] sm:$0xf]
    %v186 = vld [vmem:[#allocation4 + $0xa8] sm:$0xf]
    %v187 = vld [vmem:[#allocation4 + $0xac] sm:$0xf]
    %v188 = vld [vmem:[#allocation4 + $0xb0] sm:$0xf]
    %v189 = vld [vmem:[#allocation4 + $0xb4] sm:$0xf]
    %v190 = vld [vmem:[#allocation4 + $0xb8] sm:$0xf]
    %v191 = vld [vmem:[#allocation4 + $0xbc] sm:$0xf]
    %v192 = vld [vmem:[#allocation4 + $0xc0] sm:$0xf]
    %v193 = vld [vmem:[#allocation4 + $0xc4] sm:$0xf]
    %v194 = vld [vmem:[#allocation4 + $0xc8] sm:$0xf]
    %v195 = vld [vmem:[#allocation4 + $0xcc] sm:$0xf]
    %v196 = vld [vmem:[#allocation4 + $0xd0] sm:$0xf]
    %v197 = vld [vmem:[#allocation4 + $0xd4] sm:$0xf]
    %v198 = vld [vmem:[#allocation4 + $0xd8] sm:$0xf]
    %v199 = vld [vmem:[#allocation4 + $0xdc] sm:$0xf]
    %v200 = vld [vmem:[#allocation4 + $0xe0] sm:$0xf]
    %v201 = vld [vmem:[#allocation4 + $0xe4] sm:$0xf]
    %v202 = vld [vmem:[#allocation4 + $0xe8] sm:$0xf]
    %v203 = vld [vmem:[#allocation4 + $0xec] sm:$0xf]
    %v204 = vld [vmem:[#allocation4 + $0xf0] sm:$0xf]
    %v205 = vld [vmem:[#allocation4 + $0xf4] sm:$0xf]
    %v206 = vld [vmem:[#allocation4 + $0xf8] sm:$0xf]
    %v207 = vld [vmem:[#allocation4 + $0xfc] sm:$0xf]
    %v208 = vld [vmem:[#allocation4 + $0x100] sm:$0xf]
    %v209 = vld [vmem:[#allocation4 + $0x104] sm:$0xf]
    %v210 = vld [vmem:[#allocation4 + $0x108] sm:$0xf]
    %v211 = vld [vmem:[#allocation4 + $0x10c] sm:$0xf]
    %v212 = vld [vmem:[#allocation4 + $0x110] sm:$0xf]
    %v213 = vld [vmem:[#allocation4 + $0x114] sm:$0xf]
    %v214 = vld [vmem:[#allocation4 + $0x118] sm:$0xf]
    %v215 = vld [vmem:[#allocation4 + $0x11c] sm:$0xf]
    %v216 = vld [vmem:[#allocation4 + $0x120] sm:$0xf]
    %v217 = vld [vmem:[#allocation4 + $0x124] sm:$0xf]
    %v218 = vld [vmem:[#allocation4 + $0x128] sm:$0xf]
    %v219 = vld [vmem:[#allocation4 + $0x12c] sm:$0xf]
    %v220 = vld [vmem:[#allocation4 + $0x130] sm:$0xf]
    %v221 = vld [vmem:[#allocation4 + $0x134] sm:$0xf]
    %v222 = vld [vmem:[#allocation4 + $0x138] sm:$0xf]
    %v223 = vld [vmem:[#allocation4 + $0x13c] sm:$0xf]
    %v224 = vld [vmem:[#allocation4 + $0x140] sm:$0xf]
    %v225 = vld [vmem:[#allocation4 + $0x144] sm:$0xf]
    %v226 = vld [vmem:[#allocation4 + $0x148] sm:$0xf]
    %v227 = vld [vmem:[#allocation4 + $0x14c] sm:$0xf]
    %v228 = vld [vmem:[#allocation4 + $0x150] sm:$0xf]
    %v229 = vld [vmem:[#allocation4 + $0x154] sm:$0xf]
    %v230 = vld [vmem:[#allocation4 + $0x158] sm:$0xf]
    %v231 = vld [vmem:[#allocation4 + $0x15c] sm:$0xf]
    %v232 = vld [vmem:[#allocation4 + $0x160] sm:$0xf]
    %v233 = vld [vmem:[#allocation4 + $0x164] sm:$0xf]
    %v234 = vld [vmem:[#allocation4 + $0x168] sm:$0xf]
    %v235 = vld [vmem:[#allocation4 + $0x16c] sm:$0xf]
    %v236 = vld [vmem:[#allocation4 + $0x170] sm:$0xf]
    %v237 = vld [vmem:[#allocation4 + $0x174] sm:$0xf]
    %v238 = vld [vmem:[#allocation4 + $0x178] sm:$0xf]
    %v239 = vld [vmem:[#allocation4 + $0x17c] sm:$0xf]
    %v240 = vld [vmem:[#allocation4 + $0x180] sm:$0xf]
    %v241 = vld [vmem:[#allocation4 + $0x184] sm:$0xf]
    %v242 = vld [vmem:[#allocation4 + $0x188] sm:$0xf]
    %v243 = vld [vmem:[#allocation4 + $0x18c] sm:$0xf]
    %v244 = vld [vmem:[#allocation4 + $0x190] sm:$0xf]
    %v245 = vld [vmem:[#allocation4 + $0x194] sm:$0xf]
    %v246 = vld [vmem:[#allocation4 + $0x198] sm:$0xf]
    %v247 = vld [vmem:[#allocation4 + $0x19c] sm:$0xf]
    %v248 = vld [vmem:[#allocation4 + $0x1a0] sm:$0xf]
    %v249 = vld [vmem:[#allocation4 + $0x1a4] sm:$0xf]
    %v250 = vld [vmem:[#allocation4 + $0x1a8] sm:$0xf]
    %v251 = vld [vmem:[#allocation4 + $0x1ac] sm:$0xf]
    %v252 = vld [vmem:[#allocation4 + $0x1b0] sm:$0xf]
    %v253 = vld [vmem:[#allocation4 + $0x1b4] sm:$0xf]
    %v254 = vld [vmem:[#allocation4 + $0x1b8] sm:$0xf]
    %v255 = vld [vmem:[#allocation4 + $0x1bc] sm:$0xf]
    %v256 = vld [vmem:[#allocation4 + $0x1c0] sm:$0xf]
    %v257 = vld [vmem:[#allocation4 + $0x1c4] sm:$0xf]
    %v258 = vld [vmem:[#allocation4 + $0x1c8] sm:$0xf]
    %v259 = vld [vmem:[#allocation4 + $0x1cc] sm:$0xf]
    %v260 = vld [vmem:[#allocation4 + $0x1d0] sm:$0xf]
    %v261 = vld [vmem:[#allocation4 + $0x1d4] sm:$0xf]
    %v262 = vld [vmem:[#allocation4 + $0x1d8] sm:$0xf]
    %v263 = vld [vmem:[#allocation4 + $0x1dc] sm:$0xf]
    %v264 = vld [vmem:[#allocation4 + $0x1e0] sm:$0xf]
    %v265 = vld [vmem:[#allocation4 + $0x1e4] sm:$0xf]
    %v266 = vld [vmem:[#allocation4 + $0x1e8] sm:$0xf]
    %v267 = vld [vmem:[#allocation4 + $0x1ec] sm:$0xf]
    %v268 = vld [vmem:[#allocation4 + $0x1f0] sm:$0xf]
    %v269 = vld [vmem:[#allocation4 + $0x1f4] sm:$0xf]
    %v270 = vld [vmem:[#allocation4 + $0x1f8] sm:$0xf]
    %v271 = vld [vmem:[#allocation4 + $0x1fc] sm:$0xf]
    %v272 = vld [vmem:[#allocation4 + $0x200] sm:$0xf]
    %v273 = vld [vmem:[#allocation4 + $0x204] sm:$0xf]
    %v274 = vld [vmem:[#allocation4 + $0x208] sm:$0xf]
    %v275 = vld [vmem:[#allocation4 + $0x20c] sm:$0xf]
    %v276 = vld [vmem:[#allocation4 + $0x210] sm:$0xf]
    %v277 = vld [vmem:[#allocation4 + $0x214] sm:$0xf]
    %v278 = vld [vmem:[#allocation4 + $0x218] sm:$0xf]
    %v279 = vld [vmem:[#allocation4 + $0x21c] sm:$0xf]
    %v280 = vld [vmem:[#allocation4 + $0x220] sm:$0xf]
    %v281 = vld [vmem:[#allocation4 + $0x224] sm:$0xf]
    %v282 = vld [vmem:[#allocation4 + $0x228] sm:$0xf]
    %v283 = vld [vmem:[#allocation4 + $0x22c] sm:$0xf]
    %v284 = vld [vmem:[#allocation4 + $0x230] sm:$0xf]
    %v285 = vld [vmem:[#allocation4 + $0x234] sm:$0xf]
    %v286 = vld [vmem:[#allocation4 + $0x238] sm:$0xf]
    %v287 = vld [vmem:[#allocation4 + $0x23c] sm:$0xf]
    %v288 = vld [vmem:[#allocation4 + $0x240] sm:$0xf]
    %v289 = vld [vmem:[#allocation4 + $0x244] sm:$0xf]
    %v290 = vld [vmem:[#allocation4 + $0x248] sm:$0xf]
    %v291 = vld [vmem:[#allocation4 + $0x24c] sm:$0xf]
    %v292 = vld [vmem:[#allocation4 + $0x250] sm:$0xf]
    %v293 = vld [vmem:[#allocation4 + $0x254] sm:$0xf]
    %v294 = vld [vmem:[#allocation4 + $0x258] sm:$0xf]
    %v295 = vld [vmem:[#allocation4 + $0x25c] sm:$0xf]
    %v296 = vld [vmem:[#allocation4 + $0x260] sm:$0xf]
    %v297 = vld [vmem:[#allocation4 + $0x264] sm:$0xf]
    %v298 = vld [vmem:[#allocation4 + $0x268] sm:$0xf]
    %v299 = vld [vmem:[#allocation4 + $0x26c] sm:$0xf]
    %v300 = vld [vmem:[#allocation4 + $0x270] sm:$0xf]
    %v301 = vld [vmem:[#allocation4 + $0x274] sm:$0xf]
    %v302 = vld [vmem:[#allocation4 + $0x278] sm:$0xf]
    %v303 = vld [vmem:[#allocation4 + $0x27c] sm:$0xf]
    %v304 = vld [vmem:[#allocation4 + $0x280] sm:$0xf]
    %v305 = vld [vmem:[#allocation4 + $0x284] sm:$0xf]
    %v306 = vld [vmem:[#allocation4 + $0x288] sm:$0xf]
    %v307 = vld [vmem:[#allocation4 + $0x28c] sm:$0xf]
    %v308 = vld [vmem:[#allocation4 + $0x290] sm:$0xf]
    %v309 = vld [vmem:[#allocation4 + $0x294] sm:$0xf]
    %v310 = vld [vmem:[#allocation4 + $0x298] sm:$0xf]
    %v311 = vld [vmem:[#allocation4 + $0x29c] sm:$0xf]
    %v312 = vld [vmem:[#allocation4 + $0x2a0] sm:$0xf]
    %v313 = vld [vmem:[#allocation4 + $0x2a4] sm:$0xf]
    %v314 = vld [vmem:[#allocation4 + $0x2a8] sm:$0xf]
    %v315 = vld [vmem:[#allocation4 + $0x2ac] sm:$0xf]
    %v316 = vld [vmem:[#allocation4 + $0x2b0] sm:$0xf]
    %v317 = vld [vmem:[#allocation4 + $0x2b4] sm:$0xf]
    %v318 = vld [vmem:[#allocation4 + $0x2b8] sm:$0xf]
    %v319 = vld [vmem:[#allocation4 + $0x2bc] sm:$0xf]
    %v320 = vld [vmem:[#allocation4 + $0x2c0] sm:$0xf]
    %v321 = vld [vmem:[#allocation4 + $0x2c4] sm:$0xf]
    %v322 = vld [vmem:[#allocation4 + $0x2c8] sm:$0xf]
    %v323 = vld [vmem:[#allocation4 + $0x2cc] sm:$0xf]
    %v324 = vld [vmem:[#allocation4 + $0x2d0] sm:$0xf]
    %v325 = vld [vmem:[#allocation4 + $0x2d4] sm:$0xf]
    %v326 = vld [vmem:[#allocation4 + $0x2d8] sm:$0xf]
    %v327 = vld [vmem:[#allocation4 + $0x2dc] sm:$0xf]
    %v328 = vld [vmem:[#allocation4 + $0x2e0] sm:$0xf]
    %v329 = vld [vmem:[#allocation4 + $0x2e4] sm:$0xf]
    %v330 = vld [vmem:[#allocation4 + $0x2e8] sm:$0xf]
    %v331 = vld [vmem:[#allocation4 + $0x2ec] sm:$0xf]
    %v332 = vld [vmem:[#allocation4 + $0x2f0] sm:$0xf]
    %v333 = vld [vmem:[#allocation4 + $0x2f4] sm:$0xf]
    %v334 = vld [vmem:[#allocation4 + $0x2f8] sm:$0xf]
    %v335 = vld [vmem:[#allocation4 + $0x2fc] sm:$0xf]
    %v336 = vld [vmem:[#allocation4 + $0x300] sm:$0xf]
    %v337 = vld [vmem:[#allocation4 + $0x304] sm:$0xf]
    %v338 = vld [vmem:[#allocation4 + $0x308] sm:$0xf]
    %v339 = vld [vmem:[#allocation4 + $0x30c] sm:$0xf]
    %v340 = vld [vmem:[#allocation4 + $0x310] sm:$0xf]
    %v341 = vld [vmem:[#allocation4 + $0x314] sm:$0xf]
    %v342 = vld [vmem:[#allocation4 + $0x318] sm:$0xf]
    %v343 = vld [vmem:[#allocation4 + $0x31c] sm:$0xf]
    %v344 = vld [vmem:[#allocation4 + $0x320] sm:$0xf]
    %v345 = vld [vmem:[#allocation4 + $0x324] sm:$0xf]
    %v346 = vld [vmem:[#allocation4 + $0x328] sm:$0xf]
    %v347 = vld [vmem:[#allocation4 + $0x32c] sm:$0xf]
    %v348 = vld [vmem:[#allocation4 + $0x330] sm:$0xf]
    %v349 = vld [vmem:[#allocation4 + $0x334] sm:$0xf]
    %v350 = vld [vmem:[#allocation4 + $0x338] sm:$0xf]
    %v351 = vld [vmem:[#allocation4 + $0x33c] sm:$0xf]
    %v352 = vld [vmem:[#allocation4 + $0x340] sm:$0xf]
    %v353 = vld [vmem:[#allocation4 + $0x344] sm:$0xf]
    %v354 = vld [vmem:[#allocation4 + $0x348] sm:$0xf]
    %v355 = vld [vmem:[#allocation4 + $0x34c] sm:$0xf]
    %v356 = vld [vmem:[#allocation4 + $0x350] sm:$0xf]
    %v357 = vld [vmem:[#allocation4 + $0x354] sm:$0xf]
    %v358 = vld [vmem:[#allocation4 + $0x358] sm:$0xf]
    %v359 = vld [vmem:[#allocation4 + $0x35c] sm:$0xf]
    %v360 = vld [vmem:[#allocation4 + $0x360] sm:$0xf]
    %v361 = vld [vmem:[#allocation4 + $0x364] sm:$0xf]
    %v362 = vld [vmem:[#allocation4 + $0x368] sm:$0xf]
    %v363 = vld [vmem:[#allocation4 + $0x36c] sm:$0xf]
    %v364 = vld [vmem:[#allocation4 + $0x370] sm:$0xf]
    %v365 = vld [vmem:[#allocation4 + $0x374] sm:$0xf]
    %v366 = vld [vmem:[#allocation4 + $0x378] sm:$0xf]
    %v367 = vld [vmem:[#allocation4 + $0x37c] sm:$0xf]
    %v368 = vld [vmem:[#allocation4 + $0x380] sm:$0xf]
    %v369 = vld [vmem:[#allocation4 + $0x384] sm:$0xf]
    %v370 = vld [vmem:[#allocation4 + $0x388] sm:$0xf]
    %v371 = vld [vmem:[#allocation4 + $0x38c] sm:$0xf]
    %v372 = vld [vmem:[#allocation4 + $0x390] sm:$0xf]
    %v373 = vld [vmem:[#allocation4 + $0x394] sm:$0xf]
    %v374 = vld [vmem:[#allocation4 + $0x398] sm:$0xf]
    %v375 = vld [vmem:[#allocation4 + $0x39c] sm:$0xf]
    %v376 = vld [vmem:[#allocation4 + $0x3a0] sm:$0xf]
    %v377 = vld [vmem:[#allocation4 + $0x3a4] sm:$0xf]
    %v378 = vld [vmem:[#allocation4 + $0x3a8] sm:$0xf]
    %v379 = vld [vmem:[#allocation4 + $0x3ac] sm:$0xf]
    %v380 = vld [vmem:[#allocation4 + $0x3b0] sm:$0xf]
    %v381 = vld [vmem:[#allocation4 + $0x3b4] sm:$0xf]
    %v382 = vld [vmem:[#allocation4 + $0x3b8] sm:$0xf]
    %v383 = vld [vmem:[#allocation4 + $0x3bc] sm:$0xf]
    %v384 = vld [vmem:[#allocation4 + $0x3c0] sm:$0xf]
    %v385 = vld [vmem:[#allocation4 + $0x3c4] sm:$0xf]
    %v386 = vld [vmem:[#allocation4 + $0x3c8] sm:$0xf]
    %v387 = vld [vmem:[#allocation4 + $0x3cc] sm:$0xf]
    %v388 = vld [vmem:[#allocation4 + $0x3d0] sm:$0xf]
    %v389 = vld [vmem:[#allocation4 + $0x3d4] sm:$0xf]
    %v390 = vld [vmem:[#allocation4 + $0x3d8] sm:$0xf]
    %v391 = vld [vmem:[#allocation4 + $0x3dc] sm:$0xf]
    %v392 = vld [vmem:[#allocation4 + $0x3e0] sm:$0xf]
    %v393 = vld [vmem:[#allocation4 + $0x3e4] sm:$0xf]
    %v394 = vld [vmem:[#allocation4 + $0x3e8] sm:$0xf]
    %v395 = vld [vmem:[#allocation4 + $0x3ec] sm:$0xf]
    %v396 = vld [vmem:[#allocation4 + $0x3f0] sm:$0xf]
    %v397 = vld [vmem:[#allocation4 + $0x3f4] sm:$0xf]
    %v398 = vld [vmem:[#allocation4 + $0x3f8] sm:$0xf]
    %v399 = vld [vmem:[#allocation4 + $0x3fc] sm:$0xf]
    %v400 = vld [vmem:[#allocation4 + $0x400] sm:$0xf]
    %v401 = vld [vmem:[#allocation4 + $0x404] sm:$0xf]
    %v402 = vld [vmem:[#allocation4 + $0x408] sm:$0xf]
    %v403 = vld [vmem:[#allocation4 + $0x40c] sm:$0xf]
    %v404 = vld [vmem:[#allocation4 + $0x410] sm:$0xf]
    %v405 = vld [vmem:[#allocation4 + $0x414] sm:$0xf]
    %v406 = vld [vmem:[#allocation4 + $0x418] sm:$0xf]
    %v407 = vld [vmem:[#allocation4 + $0x41c] sm:$0xf]
    %v408 = vld [vmem:[#allocation4 + $0x420] sm:$0xf]
    %v409 = vld [vmem:[#allocation4 + $0x424] sm:$0xf]
    %v410 = vld [vmem:[#allocation4 + $0x428] sm:$0xf]
    %v411 = vld [vmem:[#allocation4 + $0x42c] sm:$0xf]
    %v412 = vld [vmem:[#allocation4 + $0x430] sm:$0xf]
    %v413 = vld [vmem:[#allocation4 + $0x434] sm:$0xf]
    %v414 = vld [vmem:[#allocation4 + $0x438] sm:$0xf]
    %v415 = vld [vmem:[#allocation4 + $0x43c] sm:$0xf]
    %v416 = vld [vmem:[#allocation4 + $0x440] sm:$0xf]
    %v417 = vld [vmem:[#allocation4 + $0x444] sm:$0xf]
    %v418 = vld [vmem:[#allocation4 + $0x448] sm:$0xf]
    %v419 = vld [vmem:[#allocation4 + $0x44c] sm:$0xf]
    %v420 = vld [vmem:[#allocation4 + $0x450] sm:$0xf]
    %v421 = vld [vmem:[#allocation4 + $0x454] sm:$0xf]
    %v422 = vld [vmem:[#allocation4 + $0x458] sm:$0xf]
    %v423 = vld [vmem:[#allocation4 + $0x45c] sm:$0xf]
    %v424 = vld [vmem:[#allocation4 + $0x460] sm:$0xf]
    %v425 = vld [vmem:[#allocation4 + $0x464] sm:$0xf]
    %v426 = vld [vmem:[#allocation4 + $0x468] sm:$0xf]
    %v427 = vld [vmem:[#allocation4 + $0x46c] sm:$0xf]
    %v428 = vld [vmem:[#allocation4 + $0x470] sm:$0xf]
    %v429 = vld [vmem:[#allocation4 + $0x474] sm:$0xf]
    %v430 = vld [vmem:[#allocation4 + $0x478] sm:$0xf]
    %v431 = vld [vmem:[#allocation4 + $0x47c] sm:$0xf]
    %v432 = vld [vmem:[#allocation4 + $0x480] sm:$0xf]
    %v433 = vld [vmem:[#allocation4 + $0x484] sm:$0xf]
    %v434 = vld [vmem:[#allocation4 + $0x488] sm:$0xf]
    %v435 = vld [vmem:[#allocation4 + $0x48c] sm:$0xf]
    %v436 = vld [vmem:[#allocation4 + $0x490] sm:$0xf]
    %v437 = vld [vmem:[#allocation4 + $0x494] sm:$0xf]
    %v438 = vld [vmem:[#allocation4 + $0x498] sm:$0xf]
    %v439 = vld [vmem:[#allocation4 + $0x49c] sm:$0xf]
    %v440 = vld [vmem:[#allocation4 + $0x4a0] sm:$0xf]
    %v441 = vld [vmem:[#allocation4 + $0x4a4] sm:$0xf]
    %v442 = vld [vmem:[#allocation4 + $0x4a8] sm:$0xf]
    %v443 = vld [vmem:[#allocation4 + $0x4ac] sm:$0xf]
    %v444 = vld [vmem:[#allocation4 + $0x4b0] sm:$0xf]
    %v445 = vld [vmem:[#allocation4 + $0x4b4] sm:$0xf]
    %v446 = vld [vmem:[#allocation4 + $0x4b8] sm:$0xf]
    %v447 = vld [vmem:[#allocation4 + $0x4bc] sm:$0xf]
    %v448 = vld [vmem:[#allocation4 + $0x4c0] sm:$0xf]
    %v449 = vld [vmem:[#allocation4 + $0x4c4] sm:$0xf]
    %v450 = vld [vmem:[#allocation4 + $0x4c8] sm:$0xf]
    %v451 = vld [vmem:[#allocation4 + $0x4cc] sm:$0xf]
    %v452 = vld [vmem:[#allocation4 + $0x4d0] sm:$0xf]
    %v453 = vld [vmem:[#allocation4 + $0x4d4] sm:$0xf]
    %v454 = vld [vmem:[#allocation4 + $0x4d8] sm:$0xf]
    %v455 = vld [vmem:[#allocation4 + $0x4dc] sm:$0xf]
    %v456 = vld [vmem:[#allocation4 + $0x4e0] sm:$0xf]
    %v457 = vld [vmem:[#allocation4 + $0x4e4] sm:$0xf]
    %v458 = vld [vmem:[#allocation4 + $0x4e8] sm:$0xf]
    %v459 = vld [vmem:[#allocation4 + $0x4ec] sm:$0xf]
    %v460 = vld [vmem:[#allocation4 + $0x4f0] sm:$0xf]
    %v461 = vld [vmem:[#allocation4 + $0x4f4] sm:$0xf]
    %v462 = vld [vmem:[#allocation4 + $0x4f8] sm:$0xf]
    %v463 = vld [vmem:[#allocation4 + $0x4fc] sm:$0xf]
    %v464 = vld [vmem:[#allocation4 + $0x500] sm:$0xf]
    %v465 = vld [vmem:[#allocation4 + $0x504] sm:$0xf]
    %v466 = vld [vmem:[#allocation4 + $0x508] sm:$0xf]
    %v467 = vld [vmem:[#allocation4 + $0x50c] sm:$0xf]
    %v468 = vld [vmem:[#allocation4 + $0x510] sm:$0xf]
    %v469 = vld [vmem:[#allocation4 + $0x514] sm:$0xf]
    %v470 = vld [vmem:[#allocation4 + $0x518] sm:$0xf]
    %v471 = vld [vmem:[#allocation4 + $0x51c] sm:$0xf]
    %v472 = vld [vmem:[#allocation4 + $0x520] sm:$0xf]
    %v473 = vld [vmem:[#allocation4 + $0x524] sm:$0xf]
    %v474 = vld [vmem:[#allocation4 + $0x528] sm:$0xf]
    %v475 = vld [vmem:[#allocation4 + $0x52c] sm:$0xf]
    %v476 = vld [vmem:[#allocation4 + $0x530] sm:$0xf]
    %v477 = vld [vmem:[#allocation4 + $0x534] sm:$0xf]
    %v478 = vld [vmem:[#allocation4 + $0x538] sm:$0xf]
    %v479 = vld [vmem:[#allocation4 + $0x53c] sm:$0xf]
    %v480 = vld [vmem:[#allocation4 + $0x540] sm:$0xf]
    %v481 = vld [vmem:[#allocation4 + $0x544] sm:$0xf]
    %v482 = vld [vmem:[#allocation4 + $0x548] sm:$0xf]
    %v483 = vld [vmem:[#allocation4 + $0x54c] sm:$0xf]
    %v484 = vld [vmem:[#allocation4 + $0x550] sm:$0xf]
    %v485 = vld [vmem:[#allocation4 + $0x554] sm:$0xf]
    %v486 = vld [vmem:[#allocation4 + $0x558] sm:$0xf]
    %v487 = vld [vmem:[#allocation4 + $0x55c] sm:$0xf]
    %v488 = vld [vmem:[#allocation4 + $0x560] sm:$0xf]
    %v489 = vld [vmem:[#allocation4 + $0x564] sm:$0xf]
    %v490 = vld [vmem:[#allocation4 + $0x568] sm:$0xf]
    %v491 = vld [vmem:[#allocation4 + $0x56c] sm:$0xf]
    %v492 = vld [vmem:[#allocation4 + $0x570] sm:$0xf]
    %v493 = vld [vmem:[#allocation4 + $0x574] sm:$0xf]
    %v494 = vld [vmem:[#allocation4 + $0x578] sm:$0xf]
    %v495 = vld [vmem:[#allocation4 + $0x57c] sm:$0xf]
    %v496 = vld [vmem:[#allocation4 + $0x580] sm:$0xf]
    %v497 = vld [vmem:[#allocation4 + $0x584] sm:$0xf]
    %v498 = vld [vmem:[#allocation4 + $0x588] sm:$0xf]
    %v499 = vld [vmem:[#allocation4 + $0x58c] sm:$0xf]
    %v500 = vld [vmem:[#allocation4 + $0x590] sm:$0xf]
    %v501 = vld [vmem:[#allocation4 + $0x594] sm:$0xf]
    %v502 = vld [vmem:[#allocation4 + $0x598] sm:$0xf]
    %v503 = vld [vmem:[#allocation4 + $0x59c] sm:$0xf]
    %v504 = vld [vmem:[#allocation4 + $0x5a0] sm:$0xf]
    %v505 = vld [vmem:[#allocation4 + $0x5a4] sm:$0xf]
    %v506 = vld [vmem:[#allocation4 + $0x5a8] sm:$0xf]
    %v507 = vld [vmem:[#allocation4 + $0x5ac] sm:$0xf]
    %v508 = vld [vmem:[#allocation4 + $0x5b0] sm:$0xf]
    %v509 = vld [vmem:[#allocation4 + $0x5b4] sm:$0xf]
    %v510 = vld [vmem:[#allocation4 + $0x5b8] sm:$0xf]
    %v511 = vld [vmem:[#allocation4 + $0x5bc] sm:$0xf]
    %v512 = vld [vmem:[#allocation4 + $0x5c0] sm:$0xf]
    %v513 = vld [vmem:[#allocation4 + $0x5c4] sm:$0xf]
    %v514 = vld [vmem:[#allocation4 + $0x5c8] sm:$0xf]
    %v515 = vld [vmem:[#allocation4 + $0x5cc] sm:$0xf]
    %v516 = vld [vmem:[#allocation4 + $0x5d0] sm:$0xf]
    %v517 = vld [vmem:[#allocation4 + $0x5d4] sm:$0xf]
    %v518 = vld [vmem:[#allocation4 + $0x5d8] sm:$0xf]
    %v519 = vld [vmem:[#allocation4 + $0x5dc] sm:$0xf]
    %v520 = vld [vmem:[#allocation4 + $0x5e0] sm:$0xf]
    %v521 = vld [vmem:[#allocation4 + $0x5e4] sm:$0xf]
    %v522 = vld [vmem:[#allocation4 + $0x5e8] sm:$0xf]
    %v523 = vld [vmem:[#allocation4 + $0x5ec] sm:$0xf]
    %v524 = vld [vmem:[#allocation4 + $0x5f0] sm:$0xf]
    %v525 = vld [vmem:[#allocation4 + $0x5f4] sm:$0xf]
    %v526 = vld [vmem:[#allocation4 + $0x5f8] sm:$0xf]
    %v527 = vld [vmem:[#allocation4 + $0x5fc] sm:$0xf]
    %v528 = vld [vmem:[#allocation4 + $0x600] sm:$0xf]
    %v529 = vld [vmem:[#allocation4 + $0x604] sm:$0xf]
    %v530 = vld [vmem:[#allocation4 + $0x608] sm:$0xf]
    %v531 = vld [vmem:[#allocation4 + $0x60c] sm:$0xf]
    %v532 = vld [vmem:[#allocation4 + $0x610] sm:$0xf]
    %v533 = vld [vmem:[#allocation4 + $0x614] sm:$0xf]
    %v534 = vld [vmem:[#allocation4 + $0x618] sm:$0xf]
    %v535 = vld [vmem:[#allocation4 + $0x61c] sm:$0xf]
    %v536 = vld [vmem:[#allocation4 + $0x620] sm:$0xf]
    %v537 = vld [vmem:[#allocation4 + $0x624] sm:$0xf]
    %v538 = vld [vmem:[#allocation4 + $0x628] sm:$0xf]
    %v539 = vld [vmem:[#allocation4 + $0x62c] sm:$0xf]
    %v540 = vld [vmem:[#allocation4 + $0x630] sm:$0xf]
    %v541 = vld [vmem:[#allocation4 + $0x634] sm:$0xf]
    %v542 = vld [vmem:[#allocation4 + $0x638] sm:$0xf]
    %v543 = vld [vmem:[#allocation4 + $0x63c] sm:$0xf]
    %v544 = vld [vmem:[#allocation4 + $0x640] sm:$0xf]
    %v545 = vld [vmem:[#allocation4 + $0x644] sm:$0xf]
    %v546 = vld [vmem:[#allocation4 + $0x648] sm:$0xf]
    %v547 = vld [vmem:[#allocation4 + $0x64c] sm:$0xf]
    %v548 = vld [vmem:[#allocation4 + $0x650] sm:$0xf]
    %v549 = vld [vmem:[#allocation4 + $0x654] sm:$0xf]
    %v550 = vld [vmem:[#allocation4 + $0x658] sm:$0xf]
    %v551 = vld [vmem:[#allocation4 + $0x65c] sm:$0xf]
    %v552 = vld [vmem:[#allocation4 + $0x660] sm:$0xf]
    %v553 = vld [vmem:[#allocation4 + $0x664] sm:$0xf]
    %v554 = vld [vmem:[#allocation4 + $0x668] sm:$0xf]
    %v555 = vld [vmem:[#allocation4 + $0x66c] sm:$0xf]
    %v556 = vld [vmem:[#allocation4 + $0x670] sm:$0xf]
    %v557 = vld [vmem:[#allocation4 + $0x674] sm:$0xf]
    %v558 = vld [vmem:[#allocation4 + $0x678] sm:$0xf]
    %v559 = vld [vmem:[#allocation4 + $0x67c] sm:$0xf]
    %v560 = vld [vmem:[#allocation4 + $0x680] sm:$0xf]
    %v561 = vld [vmem:[#allocation4 + $0x684] sm:$0xf]
    %v562 = vld [vmem:[#allocation4 + $0x688] sm:$0xf]
    %v563 = vld [vmem:[#allocation4 + $0x68c] sm:$0xf]
    %v564 = vld [vmem:[#allocation4 + $0x690] sm:$0xf]
    %v565 = vld [vmem:[#allocation4 + $0x694] sm:$0xf]
    %v566 = vld [vmem:[#allocation4 + $0x698] sm:$0xf]
    %v567 = vld [vmem:[#allocation4 + $0x69c] sm:$0xf]
    %v568 = vld [vmem:[#allocation4 + $0x6a0] sm:$0xf]
    %v569 = vld [vmem:[#allocation4 + $0x6a4] sm:$0xf]
    %v570 = vld [vmem:[#allocation4 + $0x6a8] sm:$0xf]
    %v571 = vld [vmem:[#allocation4 + $0x6ac] sm:$0xf]
    %v572 = vld [vmem:[#allocation4 + $0x6b0] sm:$0xf]
    %v573 = vld [vmem:[#allocation4 + $0x6b4] sm:$0xf]
    %v574 = vld [vmem:[#allocation4 + $0x6b8] sm:$0xf]
    %v575 = vld [vmem:[#allocation4 + $0x6bc] sm:$0xf]
    %v576 = vld [vmem:[#allocation4 + $0x6c0] sm:$0xf]
    %v577 = vld [vmem:[#allocation4 + $0x6c4] sm:$0xf]
    %v578 = vld [vmem:[#allocation4 + $0x6c8] sm:$0xf]
    %v579 = vld [vmem:[#allocation4 + $0x6cc] sm:$0xf]
    %v580 = vld [vmem:[#allocation4 + $0x6d0] sm:$0xf]
    %v581 = vld [vmem:[#allocation4 + $0x6d4] sm:$0xf]
    %v582 = vld [vmem:[#allocation4 + $0x6d8] sm:$0xf]
    %v583 = vld [vmem:[#allocation4 + $0x6dc] sm:$0xf]
    %v584 = vld [vmem:[#allocation4 + $0x6e0] sm:$0xf]
    %v585 = vld [vmem:[#allocation4 + $0x6e4] sm:$0xf]
    %v586 = vld [vmem:[#allocation4 + $0x6e8] sm:$0xf]
    %v587 = vld [vmem:[#allocation4 + $0x6ec] sm:$0xf]
    %v588 = vld [vmem:[#allocation4 + $0x6f0] sm:$0xf]
    %v589 = vld [vmem:[#allocation4 + $0x6f4] sm:$0xf]
    %v590 = vld [vmem:[#allocation4 + $0x6f8] sm:$0xf]
    %v591 = vld [vmem:[#allocation4 + $0x6fc] sm:$0xf]
    %v592 = vld [vmem:[#allocation4 + $0x700] sm:$0xf]
    %v593 = vld [vmem:[#allocation4 + $0x704] sm:$0xf]
    %v594 = vld [vmem:[#allocation4 + $0x708] sm:$0xf]
    %v595 = vld [vmem:[#allocation4 + $0x70c] sm:$0xf]
    %v596 = vld [vmem:[#allocation4 + $0x710] sm:$0xf]
    %v597 = vld [vmem:[#allocation4 + $0x714] sm:$0xf]
    %v598 = vld [vmem:[#allocation4 + $0x718] sm:$0xf]
    %v599 = vld [vmem:[#allocation4 + $0x71c] sm:$0xf]
    %v600 = vld [vmem:[#allocation4 + $0x720] sm:$0xf]
    %v601 = vld [vmem:[#allocation4 + $0x724] sm:$0xf]
    %v602 = vld [vmem:[#allocation4 + $0x728] sm:$0xf]
    %v603 = vld [vmem:[#allocation4 + $0x72c] sm:$0xf]
    %v604 = vld [vmem:[#allocation4 + $0x730] sm:$0xf]
    %v605 = vld [vmem:[#allocation4 + $0x734] sm:$0xf]
    %v606 = vld [vmem:[#allocation4 + $0x738] sm:$0xf]
    %v607 = vld [vmem:[#allocation4 + $0x73c] sm:$0xf]
    %v608 = vld [vmem:[#allocation4 + $0x740] sm:$0xf]
    %v609 = vld [vmem:[#allocation4 + $0x744] sm:$0xf]
    %v610 = vld [vmem:[#allocation4 + $0x748] sm:$0xf]
    %v611 = vld [vmem:[#allocation4 + $0x74c] sm:$0xf]
    %v612 = vld [vmem:[#allocation4 + $0x750] sm:$0xf]
    %v613 = vld [vmem:[#allocation4 + $0x754] sm:$0xf]
    %v614 = vld [vmem:[#allocation4 + $0x758] sm:$0xf]
    %v615 = vld [vmem:[#allocation4 + $0x75c] sm:$0xf]
    %v616 = vld [vmem:[#allocation4 + $0x760] sm:$0xf]
    %v617 = vld [vmem:[#allocation4 + $0x764] sm:$0xf]
    %v618 = vld [vmem:[#allocation4 + $0x768] sm:$0xf]
    %v619 = vld [vmem:[#allocation4 + $0x76c] sm:$0xf]
    %v620 = vld [vmem:[#allocation4 + $0x770] sm:$0xf]
    %v621 = vld [vmem:[#allocation4 + $0x774] sm:$0xf]
    %v622 = vld [vmem:[#allocation4 + $0x778] sm:$0xf]
    %v623 = vld [vmem:[#allocation4 + $0x77c] sm:$0xf]
    %v624 = vld [vmem:[#allocation4 + $0x780] sm:$0xf]
    %v625 = vld [vmem:[#allocation4 + $0x784] sm:$0xf]
    %v626 = vld [vmem:[#allocation4 + $0x788] sm:$0xf]
    %v627 = vld [vmem:[#allocation4 + $0x78c] sm:$0xf]
    %v628 = vld [vmem:[#allocation4 + $0x790] sm:$0xf]
    %v629 = vld [vmem:[#allocation4 + $0x794] sm:$0xf]
    %v630 = vld [vmem:[#allocation4 + $0x798] sm:$0xf]
    %v631 = vld [vmem:[#allocation4 + $0x79c] sm:$0xf]
    %v632 = vld [vmem:[#allocation4 + $0x7a0] sm:$0xf]
    %v633 = vld [vmem:[#allocation4 + $0x7a4] sm:$0xf]
    %v634 = vld [vmem:[#allocation4 + $0x7a8] sm:$0xf]
    %v635 = vld [vmem:[#allocation4 + $0x7ac] sm:$0xf]
    %v636 = vld [vmem:[#allocation4 + $0x7b0] sm:$0xf]
    %v637 = vld [vmem:[#allocation4 + $0x7b4] sm:$0xf]
    %v638 = vld [vmem:[#allocation4 + $0x7b8] sm:$0xf]
    %v639 = vld [vmem:[#allocation4 + $0x7bc] sm:$0xf]
    %v640 = vld [vmem:[#allocation4 + $0x7c0] sm:$0xf]
    %v641 = vld [vmem:[#allocation4 + $0x7c4] sm:$0xf]
    %v642 = vld [vmem:[#allocation4 + $0x7c8] sm:$0xf]
    %v643 = vld [vmem:[#allocation4 + $0x7cc] sm:$0xf]
    %v644 = vld [vmem:[#allocation4 + $0x7d0] sm:$0xf]
    %v645 = vld [vmem:[#allocation4 + $0x7d4] sm:$0xf]
    %v646 = vld [vmem:[#allocation4 + $0x7d8] sm:$0xf]
    %v647 = vld [vmem:[#allocation4 + $0x7dc] sm:$0xf]
    %v648 = vld [vmem:[#allocation4 + $0x7e0] sm:$0xf]
    %v649 = vld [vmem:[#allocation4 + $0x7e4] sm:$0xf]
    %v650 = vld [vmem:[#allocation4 + $0x7e8] sm:$0xf]
    %v651 = vld [vmem:[#allocation4 + $0x7ec] sm:$0xf]
    %v652 = vld [vmem:[#allocation4 + $0x7f0] sm:$0xf]
    %v653 = vld [vmem:[#allocation4 + $0x7f4] sm:$0xf]
    %v654 = vld [vmem:[#allocation4 + $0x7f8] sm:$0xf]
    %v655 = vld [vmem:[#allocation4 + $0x7fc] sm:$0xf]
    %v656 = vld [vmem:[%s2] sm:$0x1]
    %v658 = vlaneseq
    %v659 = vshrl.u32 %v658, 7
    %v660 = vsub.s32 0, %v659
    %v661 = vrot.slane %v656, %v660
    %v1175 = vunpack.c.l.b16 %v144
    %v1176 = vunpack.c.l.b16 %v145
    %v1177 = vunpack.c.l.b16 %v146
    %v1178 = vunpack.c.l.b16 %v147
    %v1179 = vunpack.c.l.b16 %v148
    %v1180 = vunpack.c.l.b16 %v149
    %v1181 = vunpack.c.l.b16 %v150
    %v1182 = vunpack.c.l.b16 %v151
    %v1183 = vunpack.c.l.b16 %v152
    %v1184 = vunpack.c.l.b16 %v153
    %v1185 = vunpack.c.l.b16 %v154
    %v1186 = vunpack.c.l.b16 %v155
    %v1187 = vunpack.c.l.b16 %v156
    %v1188 = vunpack.c.l.b16 %v157
    %v1189 = vunpack.c.l.b16 %v158
    %v1190 = vunpack.c.l.b16 %v159
    %v1191 = vunpack.c.l.b16 %v160
    %v1192 = vunpack.c.l.b16 %v161
    %v1193 = vunpack.c.l.b16 %v162
    %v1194 = vunpack.c.l.b16 %v163
    %v1195 = vunpack.c.l.b16 %v164
    %v1196 = vunpack.c.l.b16 %v165
    %v1197 = vunpack.c.l.b16 %v166
    %v1198 = vunpack.c.l.b16 %v167
    %v1199 = vunpack.c.l.b16 %v168
    %v1200 = vunpack.c.l.b16 %v169
    %v1201 = vunpack.c.l.b16 %v170
    %v1202 = vunpack.c.l.b16 %v171
    %v1203 = vunpack.c.l.b16 %v172
    %v1204 = vunpack.c.l.b16 %v173
    %v1205 = vunpack.c.l.b16 %v174
    %v1206 = vunpack.c.l.b16 %v175
    %v1207 = vunpack.c.l.b16 %v176
    %v1208 = vunpack.c.l.b16 %v177
    %v1209 = vunpack.c.l.b16 %v178
    %v1210 = vunpack.c.l.b16 %v179
    %v1211 = vunpack.c.l.b16 %v180
    %v1212 = vunpack.c.l.b16 %v181
    %v1213 = vunpack.c.l.b16 %v182
    %v1214 = vunpack.c.l.b16 %v183
    %v1215 = vunpack.c.l.b16 %v184
    %v1216 = vunpack.c.l.b16 %v185
    %v1217 = vunpack.c.l.b16 %v186
    %v1218 = vunpack.c.l.b16 %v187
    %v1219 = vunpack.c.l.b16 %v188
    %v1220 = vunpack.c.l.b16 %v189
    %v1221 = vunpack.c.l.b16 %v190
    %v1222 = vunpack.c.l.b16 %v191
    %v1223 = vunpack.c.l.b16 %v192
    %v1224 = vunpack.c.l.b16 %v193
    %v1225 = vunpack.c.l.b16 %v194
    %v1226 = vunpack.c.l.b16 %v195
    %v1227 = vunpack.c.l.b16 %v196
    %v1228 = vunpack.c.l.b16 %v197
    %v1229 = vunpack.c.l.b16 %v198
    %v1230 = vunpack.c.l.b16 %v199
    %v1231 = vunpack.c.l.b16 %v200
    %v1232 = vunpack.c.l.b16 %v201
    %v1233 = vunpack.c.l.b16 %v202
    %v1234 = vunpack.c.l.b16 %v203
    %v1235 = vunpack.c.l.b16 %v204
    %v1236 = vunpack.c.l.b16 %v205
    %v1237 = vunpack.c.l.b16 %v206
    %v1238 = vunpack.c.l.b16 %v207
    %v1239 = vunpack.c.l.b16 %v208
    %v1240 = vunpack.c.l.b16 %v209
    %v1241 = vunpack.c.l.b16 %v210
    %v1242 = vunpack.c.l.b16 %v211
    %v1243 = vunpack.c.l.b16 %v212
    %v1244 = vunpack.c.l.b16 %v213
    %v1245 = vunpack.c.l.b16 %v214
    %v1246 = vunpack.c.l.b16 %v215
    %v1247 = vunpack.c.l.b16 %v216
    %v1248 = vunpack.c.l.b16 %v217
    %v1249 = vunpack.c.l.b16 %v218
    %v1250 = vunpack.c.l.b16 %v219
    %v1251 = vunpack.c.l.b16 %v220
    %v1252 = vunpack.c.l.b16 %v221
    %v1253 = vunpack.c.l.b16 %v222
    %v1254 = vunpack.c.l.b16 %v223
    %v1255 = vunpack.c.l.b16 %v224
    %v1256 = vunpack.c.l.b16 %v225
    %v1257 = vunpack.c.l.b16 %v226
    %v1258 = vunpack.c.l.b16 %v227
    %v1259 = vunpack.c.l.b16 %v228
    %v1260 = vunpack.c.l.b16 %v229
    %v1261 = vunpack.c.l.b16 %v230
    %v1262 = vunpack.c.l.b16 %v231
    %v1263 = vunpack.c.l.b16 %v232
    %v1264 = vunpack.c.l.b16 %v233
    %v1265 = vunpack.c.l.b16 %v234
    %v1266 = vunpack.c.l.b16 %v235
    %v1267 = vunpack.c.l.b16 %v236
    %v1268 = vunpack.c.l.b16 %v237
    %v1269 = vunpack.c.l.b16 %v238
    %v1270 = vunpack.c.l.b16 %v239
    %v1271 = vunpack.c.l.b16 %v240
    %v1272 = vunpack.c.l.b16 %v241
    %v1273 = vunpack.c.l.b16 %v242
    %v1274 = vunpack.c.l.b16 %v243
    %v1275 = vunpack.c.l.b16 %v244
    %v1276 = vunpack.c.l.b16 %v245
    %v1277 = vunpack.c.l.b16 %v246
    %v1278 = vunpack.c.l.b16 %v247
    %v1279 = vunpack.c.l.b16 %v248
    %v1280 = vunpack.c.l.b16 %v249
    %v1281 = vunpack.c.l.b16 %v250
    %v1282 = vunpack.c.l.b16 %v251
    %v1283 = vunpack.c.l.b16 %v252
    %v1284 = vunpack.c.l.b16 %v253
    %v1285 = vunpack.c.l.b16 %v254
    %v1286 = vunpack.c.l.b16 %v255
    %v1287 = vunpack.c.l.b16 %v256
    %v1288 = vunpack.c.l.b16 %v257
    %v1289 = vunpack.c.l.b16 %v258
    %v1290 = vunpack.c.l.b16 %v259
    %v1291 = vunpack.c.l.b16 %v260
    %v1292 = vunpack.c.l.b16 %v261
    %v1293 = vunpack.c.l.b16 %v262
    %v1294 = vunpack.c.l.b16 %v263
    %v1295 = vunpack.c.l.b16 %v264
    %v1296 = vunpack.c.l.b16 %v265
    %v1297 = vunpack.c.l.b16 %v266
    %v1298 = vunpack.c.l.b16 %v267
    %v1299 = vunpack.c.l.b16 %v268
    %v1300 = vunpack.c.l.b16 %v269
    %v1301 = vunpack.c.l.b16 %v270
    %v1302 = vunpack.c.l.b16 %v271
    %v1303 = vunpack.c.l.b16 %v272
    %v1304 = vunpack.c.l.b16 %v273
    %v1305 = vunpack.c.l.b16 %v274
    %v1306 = vunpack.c.l.b16 %v275
    %v1307 = vunpack.c.l.b16 %v276
    %v1308 = vunpack.c.l.b16 %v277
    %v1309 = vunpack.c.l.b16 %v278
    %v1310 = vunpack.c.l.b16 %v279
    %v1311 = vunpack.c.l.b16 %v280
    %v1312 = vunpack.c.l.b16 %v281
    %v1313 = vunpack.c.l.b16 %v282
    %v1314 = vunpack.c.l.b16 %v283
    %v1315 = vunpack.c.l.b16 %v284
    %v1316 = vunpack.c.l.b16 %v285
    %v1317 = vunpack.c.l.b16 %v286
    %v1318 = vunpack.c.l.b16 %v287
    %v1319 = vunpack.c.l.b16 %v288
    %v1320 = vunpack.c.l.b16 %v289
    %v1321 = vunpack.c.l.b16 %v290
    %v1322 = vunpack.c.l.b16 %v291
    %v1323 = vunpack.c.l.b16 %v292
    %v1324 = vunpack.c.l.b16 %v293
    %v1325 = vunpack.c.l.b16 %v294
    %v1326 = vunpack.c.l.b16 %v295
    %v1327 = vunpack.c.l.b16 %v296
    %v1328 = vunpack.c.l.b16 %v297
    %v1329 = vunpack.c.l.b16 %v298
    %v1330 = vunpack.c.l.b16 %v299
    %v1331 = vunpack.c.l.b16 %v300
    %v1332 = vunpack.c.l.b16 %v301
    %v1333 = vunpack.c.l.b16 %v302
    %v1334 = vunpack.c.l.b16 %v303
    %v1335 = vunpack.c.l.b16 %v304
    %v1336 = vunpack.c.l.b16 %v305
    %v1337 = vunpack.c.l.b16 %v306
    %v1338 = vunpack.c.l.b16 %v307
    %v1339 = vunpack.c.l.b16 %v308
    %v1340 = vunpack.c.l.b16 %v309
    %v1341 = vunpack.c.l.b16 %v310
    %v1342 = vunpack.c.l.b16 %v311
    %v1343 = vunpack.c.l.b16 %v312
    %v1344 = vunpack.c.l.b16 %v313
    %v1345 = vunpack.c.l.b16 %v314
    %v1346 = vunpack.c.l.b16 %v315
    %v1347 = vunpack.c.l.b16 %v316
    %v1348 = vunpack.c.l.b16 %v317
    %v1349 = vunpack.c.l.b16 %v318
    %v1350 = vunpack.c.l.b16 %v319
    %v1351 = vunpack.c.l.b16 %v320
    %v1352 = vunpack.c.l.b16 %v321
    %v1353 = vunpack.c.l.b16 %v322
    %v1354 = vunpack.c.l.b16 %v323
    %v1355 = vunpack.c.l.b16 %v324
    %v1356 = vunpack.c.l.b16 %v325
    %v1357 = vunpack.c.l.b16 %v326
    %v1358 = vunpack.c.l.b16 %v327
    %v1359 = vunpack.c.l.b16 %v328
    %v1360 = vunpack.c.l.b16 %v329
    %v1361 = vunpack.c.l.b16 %v330
    %v1362 = vunpack.c.l.b16 %v331
    %v1363 = vunpack.c.l.b16 %v332
    %v1364 = vunpack.c.l.b16 %v333
    %v1365 = vunpack.c.l.b16 %v334
    %v1366 = vunpack.c.l.b16 %v335
    %v1367 = vunpack.c.l.b16 %v336
    %v1368 = vunpack.c.l.b16 %v337
    %v1369 = vunpack.c.l.b16 %v338
    %v1370 = vunpack.c.l.b16 %v339
    %v1371 = vunpack.c.l.b16 %v340
    %v1372 = vunpack.c.l.b16 %v341
    %v1373 = vunpack.c.l.b16 %v342
    %v1374 = vunpack.c.l.b16 %v343
    %v1375 = vunpack.c.l.b16 %v344
    %v1376 = vunpack.c.l.b16 %v345
    %v1377 = vunpack.c.l.b16 %v346
    %v1378 = vunpack.c.l.b16 %v347
    %v1379 = vunpack.c.l.b16 %v348
    %v1380 = vunpack.c.l.b16 %v349
    %v1381 = vunpack.c.l.b16 %v350
    %v1382 = vunpack.c.l.b16 %v351
    %v1383 = vunpack.c.l.b16 %v352
    %v1384 = vunpack.c.l.b16 %v353
    %v1385 = vunpack.c.l.b16 %v354
    %v1386 = vunpack.c.l.b16 %v355
    %v1387 = vunpack.c.l.b16 %v356
    %v1388 = vunpack.c.l.b16 %v357
    %v1389 = vunpack.c.l.b16 %v358
    %v1390 = vunpack.c.l.b16 %v359
    %v1391 = vunpack.c.l.b16 %v360
    %v1392 = vunpack.c.l.b16 %v361
    %v1393 = vunpack.c.l.b16 %v362
    %v1394 = vunpack.c.l.b16 %v363
    %v1395 = vunpack.c.l.b16 %v364
    %v1396 = vunpack.c.l.b16 %v365
    %v1397 = vunpack.c.l.b16 %v366
    %v1398 = vunpack.c.l.b16 %v367
    %v1399 = vunpack.c.l.b16 %v368
    %v1400 = vunpack.c.l.b16 %v369
    %v1401 = vunpack.c.l.b16 %v370
    %v1402 = vunpack.c.l.b16 %v371
    %v1403 = vunpack.c.l.b16 %v372
    %v1404 = vunpack.c.l.b16 %v373
    %v1405 = vunpack.c.l.b16 %v374
    %v1406 = vunpack.c.l.b16 %v375
    %v1407 = vunpack.c.l.b16 %v376
    %v1408 = vunpack.c.l.b16 %v377
    %v1409 = vunpack.c.l.b16 %v378
    %v1410 = vunpack.c.l.b16 %v379
    %v1411 = vunpack.c.l.b16 %v380
    %v1412 = vunpack.c.l.b16 %v381
    %v1413 = vunpack.c.l.b16 %v382
    %v1414 = vunpack.c.l.b16 %v383
    %v1415 = vunpack.c.l.b16 %v384
    %v1416 = vunpack.c.l.b16 %v385
    %v1417 = vunpack.c.l.b16 %v386
    %v1418 = vunpack.c.l.b16 %v387
    %v1419 = vunpack.c.l.b16 %v388
    %v1420 = vunpack.c.l.b16 %v389
    %v1421 = vunpack.c.l.b16 %v390
    %v1422 = vunpack.c.l.b16 %v391
    %v1423 = vunpack.c.l.b16 %v392
    %v1424 = vunpack.c.l.b16 %v393
    %v1425 = vunpack.c.l.b16 %v394
    %v1426 = vunpack.c.l.b16 %v395
    %v1427 = vunpack.c.l.b16 %v396
    %v1428 = vunpack.c.l.b16 %v397
    %v1429 = vunpack.c.l.b16 %v398
    %v1430 = vunpack.c.l.b16 %v399
    %v1431 = vunpack.c.l.b16 %v400
    %v1432 = vunpack.c.l.b16 %v401
    %v1433 = vunpack.c.l.b16 %v402
    %v1434 = vunpack.c.l.b16 %v403
    %v1435 = vunpack.c.l.b16 %v404
    %v1436 = vunpack.c.l.b16 %v405
    %v1437 = vunpack.c.l.b16 %v406
    %v1438 = vunpack.c.l.b16 %v407
    %v1439 = vunpack.c.l.b16 %v408
    %v1440 = vunpack.c.l.b16 %v409
    %v1441 = vunpack.c.l.b16 %v410
    %v1442 = vunpack.c.l.b16 %v411
    %v1443 = vunpack.c.l.b16 %v412
    %v1444 = vunpack.c.l.b16 %v413
    %v1445 = vunpack.c.l.b16 %v414
    %v1446 = vunpack.c.l.b16 %v415
    %v1447 = vunpack.c.l.b16 %v416
    %v1448 = vunpack.c.l.b16 %v417
    %v1449 = vunpack.c.l.b16 %v418
    %v1450 = vunpack.c.l.b16 %v419
    %v1451 = vunpack.c.l.b16 %v420
    %v1452 = vunpack.c.l.b16 %v421
    %v1453 = vunpack.c.l.b16 %v422
    %v1454 = vunpack.c.l.b16 %v423
    %v1455 = vunpack.c.l.b16 %v424
    %v1456 = vunpack.c.l.b16 %v425
    %v1457 = vunpack.c.l.b16 %v426
    %v1458 = vunpack.c.l.b16 %v427
    %v1459 = vunpack.c.l.b16 %v428
    %v1460 = vunpack.c.l.b16 %v429
    %v1461 = vunpack.c.l.b16 %v430
    %v1462 = vunpack.c.l.b16 %v431
    %v1463 = vunpack.c.l.b16 %v432
    %v1464 = vunpack.c.l.b16 %v433
    %v1465 = vunpack.c.l.b16 %v434
    %v1466 = vunpack.c.l.b16 %v435
    %v1467 = vunpack.c.l.b16 %v436
    %v1468 = vunpack.c.l.b16 %v437
    %v1469 = vunpack.c.l.b16 %v438
    %v1470 = vunpack.c.l.b16 %v439
    %v1471 = vunpack.c.l.b16 %v440
    %v1472 = vunpack.c.l.b16 %v441
    %v1473 = vunpack.c.l.b16 %v442
    %v1474 = vunpack.c.l.b16 %v443
    %v1475 = vunpack.c.l.b16 %v444
    %v1476 = vunpack.c.l.b16 %v445
    %v1477 = vunpack.c.l.b16 %v446
    %v1478 = vunpack.c.l.b16 %v447
    %v1479 = vunpack.c.l.b16 %v448
    %v1480 = vunpack.c.l.b16 %v449
    %v1481 = vunpack.c.l.b16 %v450
    %v1482 = vunpack.c.l.b16 %v451
    %v1483 = vunpack.c.l.b16 %v452
    %v1484 = vunpack.c.l.b16 %v453
    %v1485 = vunpack.c.l.b16 %v454
    %v1486 = vunpack.c.l.b16 %v455
    %v1487 = vunpack.c.l.b16 %v456
    %v1488 = vunpack.c.l.b16 %v457
    %v1489 = vunpack.c.l.b16 %v458
    %v1490 = vunpack.c.l.b16 %v459
    %v1491 = vunpack.c.l.b16 %v460
    %v1492 = vunpack.c.l.b16 %v461
    %v1493 = vunpack.c.l.b16 %v462
    %v1494 = vunpack.c.l.b16 %v463
    %v1495 = vunpack.c.l.b16 %v464
    %v1496 = vunpack.c.l.b16 %v465
    %v1497 = vunpack.c.l.b16 %v466
    %v1498 = vunpack.c.l.b16 %v467
    %v1499 = vunpack.c.l.b16 %v468
    %v1500 = vunpack.c.l.b16 %v469
    %v1501 = vunpack.c.l.b16 %v470
    %v1502 = vunpack.c.l.b16 %v471
    %v1503 = vunpack.c.l.b16 %v472
    %v1504 = vunpack.c.l.b16 %v473
    %v1505 = vunpack.c.l.b16 %v474
    %v1506 = vunpack.c.l.b16 %v475
    %v1507 = vunpack.c.l.b16 %v476
    %v1508 = vunpack.c.l.b16 %v477
    %v1509 = vunpack.c.l.b16 %v478
    %v1510 = vunpack.c.l.b16 %v479
    %v1511 = vunpack.c.l.b16 %v480
    %v1512 = vunpack.c.l.b16 %v481
    %v1513 = vunpack.c.l.b16 %v482
    %v1514 = vunpack.c.l.b16 %v483
    %v1515 = vunpack.c.l.b16 %v484
    %v1516 = vunpack.c.l.b16 %v485
    %v1517 = vunpack.c.l.b16 %v486
    %v1518 = vunpack.c.l.b16 %v487
    %v1519 = vunpack.c.l.b16 %v488
    %v1520 = vunpack.c.l.b16 %v489
    %v1521 = vunpack.c.l.b16 %v490
    %v1522 = vunpack.c.l.b16 %v491
    %v1523 = vunpack.c.l.b16 %v492
    %v1524 = vunpack.c.l.b16 %v493
    %v1525 = vunpack.c.l.b16 %v494
    %v1526 = vunpack.c.l.b16 %v495
    %v1527 = vunpack.c.l.b16 %v496
    %v1528 = vunpack.c.l.b16 %v497
    %v1529 = vunpack.c.l.b16 %v498
    %v1530 = vunpack.c.l.b16 %v499
    %v1531 = vunpack.c.l.b16 %v500
    %v1532 = vunpack.c.l.b16 %v501
    %v1533 = vunpack.c.l.b16 %v502
    %v1534 = vunpack.c.l.b16 %v503
    %v1535 = vunpack.c.l.b16 %v504
    %v1536 = vunpack.c.l.b16 %v505
    %v1537 = vunpack.c.l.b16 %v506
    %v1538 = vunpack.c.l.b16 %v507
    %v1539 = vunpack.c.l.b16 %v508
    %v1540 = vunpack.c.l.b16 %v509
    %v1541 = vunpack.c.l.b16 %v510
    %v1542 = vunpack.c.l.b16 %v511
    %v1543 = vunpack.c.l.b16 %v512
    %v1544 = vunpack.c.l.b16 %v513
    %v1545 = vunpack.c.l.b16 %v514
    %v1546 = vunpack.c.l.b16 %v515
    %v1547 = vunpack.c.l.b16 %v516
    %v1548 = vunpack.c.l.b16 %v517
    %v1549 = vunpack.c.l.b16 %v518
    %v1550 = vunpack.c.l.b16 %v519
    %v1551 = vunpack.c.l.b16 %v520
    %v1552 = vunpack.c.l.b16 %v521
    %v1553 = vunpack.c.l.b16 %v522
    %v1554 = vunpack.c.l.b16 %v523
    %v1555 = vunpack.c.l.b16 %v524
    %v1556 = vunpack.c.l.b16 %v525
    %v1557 = vunpack.c.l.b16 %v526
    %v1558 = vunpack.c.l.b16 %v527
    %v1559 = vunpack.c.l.b16 %v528
    %v1560 = vunpack.c.l.b16 %v529
    %v1561 = vunpack.c.l.b16 %v530
    %v1562 = vunpack.c.l.b16 %v531
    %v1563 = vunpack.c.l.b16 %v532
    %v1564 = vunpack.c.l.b16 %v533
    %v1565 = vunpack.c.l.b16 %v534
    %v1566 = vunpack.c.l.b16 %v535
    %v1567 = vunpack.c.l.b16 %v536
    %v1568 = vunpack.c.l.b16 %v537
    %v1569 = vunpack.c.l.b16 %v538
    %v1570 = vunpack.c.l.b16 %v539
    %v1571 = vunpack.c.l.b16 %v540
    %v1572 = vunpack.c.l.b16 %v541
    %v1573 = vunpack.c.l.b16 %v542
    %v1574 = vunpack.c.l.b16 %v543
    %v1575 = vunpack.c.l.b16 %v544
    %v1576 = vunpack.c.l.b16 %v545
    %v1577 = vunpack.c.l.b16 %v546
    %v1578 = vunpack.c.l.b16 %v547
    %v1579 = vunpack.c.l.b16 %v548
    %v1580 = vunpack.c.l.b16 %v549
    %v1581 = vunpack.c.l.b16 %v550
    %v1582 = vunpack.c.l.b16 %v551
    %v1583 = vunpack.c.l.b16 %v552
    %v1584 = vunpack.c.l.b16 %v553
    %v1585 = vunpack.c.l.b16 %v554
    %v1586 = vunpack.c.l.b16 %v555
    %v1587 = vunpack.c.l.b16 %v556
    %v1588 = vunpack.c.l.b16 %v557
    %v1589 = vunpack.c.l.b16 %v558
    %v1590 = vunpack.c.l.b16 %v559
    %v1591 = vunpack.c.l.b16 %v560
    %v1592 = vunpack.c.l.b16 %v561
    %v1593 = vunpack.c.l.b16 %v562
    %v1594 = vunpack.c.l.b16 %v563
    %v1595 = vunpack.c.l.b16 %v564
    %v1596 = vunpack.c.l.b16 %v565
    %v1597 = vunpack.c.l.b16 %v566
    %v1598 = vunpack.c.l.b16 %v567
    %v1599 = vunpack.c.l.b16 %v568
    %v1600 = vunpack.c.l.b16 %v569
    %v1601 = vunpack.c.l.b16 %v570
    %v1602 = vunpack.c.l.b16 %v571
    %v1603 = vunpack.c.l.b16 %v572
    %v1604 = vunpack.c.l.b16 %v573
    %v1605 = vunpack.c.l.b16 %v574
    %v1606 = vunpack.c.l.b16 %v575
    %v1607 = vunpack.c.l.b16 %v576
    %v1608 = vunpack.c.l.b16 %v577
    %v1609 = vunpack.c.l.b16 %v578
    %v1610 = vunpack.c.l.b16 %v579
    %v1611 = vunpack.c.l.b16 %v580
    %v1612 = vunpack.c.l.b16 %v581
    %v1613 = vunpack.c.l.b16 %v582
    %v1614 = vunpack.c.l.b16 %v583
    %v1615 = vunpack.c.l.b16 %v584
    %v1616 = vunpack.c.l.b16 %v585
    %v1617 = vunpack.c.l.b16 %v586
    %v1618 = vunpack.c.l.b16 %v587
    %v1619 = vunpack.c.l.b16 %v588
    %v1620 = vunpack.c.l.b16 %v589
    %v1621 = vunpack.c.l.b16 %v590
    %v1622 = vunpack.c.l.b16 %v591
    %v1623 = vunpack.c.l.b16 %v592
    %v1624 = vunpack.c.l.b16 %v593
    %v1625 = vunpack.c.l.b16 %v594
    %v1626 = vunpack.c.l.b16 %v595
    %v1627 = vunpack.c.l.b16 %v596
    %v1628 = vunpack.c.l.b16 %v597
    %v1629 = vunpack.c.l.b16 %v598
    %v1630 = vunpack.c.l.b16 %v599
    %v1631 = vunpack.c.l.b16 %v600
    %v1632 = vunpack.c.l.b16 %v601
    %v1633 = vunpack.c.l.b16 %v602
    %v1634 = vunpack.c.l.b16 %v603
    %v1635 = vunpack.c.l.b16 %v604
    %v1636 = vunpack.c.l.b16 %v605
    %v1637 = vunpack.c.l.b16 %v606
    %v1638 = vunpack.c.l.b16 %v607
    %v1639 = vunpack.c.l.b16 %v608
    %v1640 = vunpack.c.l.b16 %v609
    %v1641 = vunpack.c.l.b16 %v610
    %v1642 = vunpack.c.l.b16 %v611
    %v1643 = vunpack.c.l.b16 %v612
    %v1644 = vunpack.c.l.b16 %v613
    %v1645 = vunpack.c.l.b16 %v614
    %v1646 = vunpack.c.l.b16 %v615
    %v1647 = vunpack.c.l.b16 %v616
    %v1648 = vunpack.c.l.b16 %v617
    %v1649 = vunpack.c.l.b16 %v618
    %v1650 = vunpack.c.l.b16 %v619
    %v1651 = vunpack.c.l.b16 %v620
    %v1652 = vunpack.c.l.b16 %v621
    %v1653 = vunpack.c.l.b16 %v622
    %v1654 = vunpack.c.l.b16 %v623
    %v1655 = vunpack.c.l.b16 %v624
    %v1656 = vunpack.c.l.b16 %v625
    %v1657 = vunpack.c.l.b16 %v626
    %v1658 = vunpack.c.l.b16 %v627
    %v1659 = vunpack.c.l.b16 %v628
    %v1660 = vunpack.c.l.b16 %v629
    %v1661 = vunpack.c.l.b16 %v630
    %v1662 = vunpack.c.l.b16 %v631
    %v1663 = vunpack.c.l.b16 %v632
    %v1664 = vunpack.c.l.b16 %v633
    %v1665 = vunpack.c.l.b16 %v634
    %v1666 = vunpack.c.l.b16 %v635
    %v1667 = vunpack.c.l.b16 %v636
    %v1668 = vunpack.c.l.b16 %v637
    %v1669 = vunpack.c.l.b16 %v638
    %v1670 = vunpack.c.l.b16 %v639
    %v1671 = vunpack.c.l.b16 %v640
    %v1672 = vunpack.c.l.b16 %v641
    %v1673 = vunpack.c.l.b16 %v642
    %v1674 = vunpack.c.l.b16 %v643
    %v1675 = vunpack.c.l.b16 %v644
    %v1676 = vunpack.c.l.b16 %v645
    %v1677 = vunpack.c.l.b16 %v646
    %v1678 = vunpack.c.l.b16 %v647
    %v1679 = vunpack.c.l.b16 %v648
    %v1680 = vunpack.c.l.b16 %v649
    %v1681 = vunpack.c.l.b16 %v650
    %v1682 = vunpack.c.l.b16 %v651
    %v1683 = vunpack.c.l.b16 %v652
    %v1684 = vunpack.c.l.b16 %v653
    %v1685 = vunpack.c.l.b16 %v654
    %v1686 = vunpack.c.l.b16 %v655
    %v1687 = vpack.c.b16 %v1176, %v1175
    %v1688 = vpack.c.b16 %v1178, %v1177
    %v1689 = vpack.c.b16 %v1180, %v1179
    %v1690 = vpack.c.b16 %v1182, %v1181
    %v1691 = vpack.c.b16 %v1184, %v1183
    %v1692 = vpack.c.b16 %v1186, %v1185
    %v1693 = vpack.c.b16 %v1188, %v1187
    %v1694 = vpack.c.b16 %v1190, %v1189
    %v1695 = vpack.c.b16 %v1192, %v1191
    %v1696 = vpack.c.b16 %v1194, %v1193
    %v1697 = vpack.c.b16 %v1196, %v1195
    %v1698 = vpack.c.b16 %v1198, %v1197
    %v1699 = vpack.c.b16 %v1200, %v1199
    %v1700 = vpack.c.b16 %v1202, %v1201
    %v1701 = vpack.c.b16 %v1204, %v1203
    %v1702 = vpack.c.b16 %v1206, %v1205
    %v1703 = vpack.c.b16 %v1208, %v1207
    %v1704 = vpack.c.b16 %v1210, %v1209
    %v1705 = vpack.c.b16 %v1212, %v1211
    %v1706 = vpack.c.b16 %v1214, %v1213
    %v1707 = vpack.c.b16 %v1216, %v1215
    %v1708 = vpack.c.b16 %v1218, %v1217
    %v1709 = vpack.c.b16 %v1220, %v1219
    %v1710 = vpack.c.b16 %v1222, %v1221
    %v1711 = vpack.c.b16 %v1224, %v1223
    %v1712 = vpack.c.b16 %v1226, %v1225
    %v1713 = vpack.c.b16 %v1228, %v1227
    %v1714 = vpack.c.b16 %v1230, %v1229
    %v1715 = vpack.c.b16 %v1232, %v1231
    %v1716 = vpack.c.b16 %v1234, %v1233
    %v1717 = vpack.c.b16 %v1236, %v1235
    %v1718 = vpack.c.b16 %v1238, %v1237
    %v1719 = vpack.c.b16 %v1240, %v1239
    %v1720 = vpack.c.b16 %v1242, %v1241
    %v1721 = vpack.c.b16 %v1244, %v1243
    %v1722 = vpack.c.b16 %v1246, %v1245
    %v1723 = vpack.c.b16 %v1248, %v1247
    %v1724 = vpack.c.b16 %v1250, %v1249
    %v1725 = vpack.c.b16 %v1252, %v1251
    %v1726 = vpack.c.b16 %v1254, %v1253
    %v1727 = vpack.c.b16 %v1256, %v1255
    %v1728 = vpack.c.b16 %v1258, %v1257
    %v1729 = vpack.c.b16 %v1260, %v1259
    %v1730 = vpack.c.b16 %v1262, %v1261
    %v1731 = vpack.c.b16 %v1264, %v1263
    %v1732 = vpack.c.b16 %v1266, %v1265
    %v1733 = vpack.c.b16 %v1268, %v1267
    %v1734 = vpack.c.b16 %v1270, %v1269
    %v1735 = vpack.c.b16 %v1272, %v1271
    %v1736 = vpack.c.b16 %v1274, %v1273
    %v1737 = vpack.c.b16 %v1276, %v1275
    %v1738 = vpack.c.b16 %v1278, %v1277
    %v1739 = vpack.c.b16 %v1280, %v1279
    %v1740 = vpack.c.b16 %v1282, %v1281
    %v1741 = vpack.c.b16 %v1284, %v1283
    %v1742 = vpack.c.b16 %v1286, %v1285
    %v1743 = vpack.c.b16 %v1288, %v1287
    %v1744 = vpack.c.b16 %v1290, %v1289
    %v1745 = vpack.c.b16 %v1292, %v1291
    %v1746 = vpack.c.b16 %v1294, %v1293
    %v1747 = vpack.c.b16 %v1296, %v1295
    %v1748 = vpack.c.b16 %v1298, %v1297
    %v1749 = vpack.c.b16 %v1300, %v1299
    %v1750 = vpack.c.b16 %v1302, %v1301
    %v1751 = vpack.c.b16 %v1304, %v1303
    %v1752 = vpack.c.b16 %v1306, %v1305
    %v1753 = vpack.c.b16 %v1308, %v1307
    %v1754 = vpack.c.b16 %v1310, %v1309
    %v1755 = vpack.c.b16 %v1312, %v1311
    %v1756 = vpack.c.b16 %v1314, %v1313
    %v1757 = vpack.c.b16 %v1316, %v1315
    %v1758 = vpack.c.b16 %v1318, %v1317
    %v1759 = vpack.c.b16 %v1320, %v1319
    %v1760 = vpack.c.b16 %v1322, %v1321
    %v1761 = vpack.c.b16 %v1324, %v1323
    %v1762 = vpack.c.b16 %v1326, %v1325
    %v1763 = vpack.c.b16 %v1328, %v1327
    %v1764 = vpack.c.b16 %v1330, %v1329
    %v1765 = vpack.c.b16 %v1332, %v1331
    %v1766 = vpack.c.b16 %v1334, %v1333
    %v1767 = vpack.c.b16 %v1336, %v1335
    %v1768 = vpack.c.b16 %v1338, %v1337
    %v1769 = vpack.c.b16 %v1340, %v1339
    %v1770 = vpack.c.b16 %v1342, %v1341
    %v1771 = vpack.c.b16 %v1344, %v1343
    %v1772 = vpack.c.b16 %v1346, %v1345
    %v1773 = vpack.c.b16 %v1348, %v1347
    %v1774 = vpack.c.b16 %v1350, %v1349
    %v1775 = vpack.c.b16 %v1352, %v1351
    %v1776 = vpack.c.b16 %v1354, %v1353
    %v1777 = vpack.c.b16 %v1356, %v1355
    %v1778 = vpack.c.b16 %v1358, %v1357
    %v1779 = vpack.c.b16 %v1360, %v1359
    %v1780 = vpack.c.b16 %v1362, %v1361
    %v1781 = vpack.c.b16 %v1364, %v1363
    %v1782 = vpack.c.b16 %v1366, %v1365
    %v1783 = vpack.c.b16 %v1368, %v1367
    %v1784 = vpack.c.b16 %v1370, %v1369
    %v1785 = vpack.c.b16 %v1372, %v1371
    %v1786 = vpack.c.b16 %v1374, %v1373
    %v1787 = vpack.c.b16 %v1376, %v1375
    %v1788 = vpack.c.b16 %v1378, %v1377
    %v1789 = vpack.c.b16 %v1380, %v1379
    %v1790 = vpack.c.b16 %v1382, %v1381
    %v1791 = vpack.c.b16 %v1384, %v1383
    %v1792 = vpack.c.b16 %v1386, %v1385
    %v1793 = vpack.c.b16 %v1388, %v1387
    %v1794 = vpack.c.b16 %v1390, %v1389
    %v1795 = vpack.c.b16 %v1392, %v1391
    %v1796 = vpack.c.b16 %v1394, %v1393
    %v1797 = vpack.c.b16 %v1396, %v1395
    %v1798 = vpack.c.b16 %v1398, %v1397
    %v1799 = vpack.c.b16 %v1400, %v1399
    %v1800 = vpack.c.b16 %v1402, %v1401
    %v1801 = vpack.c.b16 %v1404, %v1403
    %v1802 = vpack.c.b16 %v1406, %v1405
    %v1803 = vpack.c.b16 %v1408, %v1407
    %v1804 = vpack.c.b16 %v1410, %v1409
    %v1805 = vpack.c.b16 %v1412, %v1411
    %v1806 = vpack.c.b16 %v1414, %v1413
    %v1807 = vpack.c.b16 %v1416, %v1415
    %v1808 = vpack.c.b16 %v1418, %v1417
    %v1809 = vpack.c.b16 %v1420, %v1419
    %v1810 = vpack.c.b16 %v1422, %v1421
    %v1811 = vpack.c.b16 %v1424, %v1423
    %v1812 = vpack.c.b16 %v1426, %v1425
    %v1813 = vpack.c.b16 %v1428, %v1427
    %v1814 = vpack.c.b16 %v1430, %v1429
    %v1815 = vpack.c.b16 %v1432, %v1431
    %v1816 = vpack.c.b16 %v1434, %v1433
    %v1817 = vpack.c.b16 %v1436, %v1435
    %v1818 = vpack.c.b16 %v1438, %v1437
    %v1819 = vpack.c.b16 %v1440, %v1439
    %v1820 = vpack.c.b16 %v1442, %v1441
    %v1821 = vpack.c.b16 %v1444, %v1443
    %v1822 = vpack.c.b16 %v1446, %v1445
    %v1823 = vpack.c.b16 %v1448, %v1447
    %v1824 = vpack.c.b16 %v1450, %v1449
    %v1825 = vpack.c.b16 %v1452, %v1451
    %v1826 = vpack.c.b16 %v1454, %v1453
    %v1827 = vpack.c.b16 %v1456, %v1455
    %v1828 = vpack.c.b16 %v1458, %v1457
    %v1829 = vpack.c.b16 %v1460, %v1459
    %v1830 = vpack.c.b16 %v1462, %v1461
    %v1831 = vpack.c.b16 %v1464, %v1463
    %v1832 = vpack.c.b16 %v1466, %v1465
    %v1833 = vpack.c.b16 %v1468, %v1467
    %v1834 = vpack.c.b16 %v1470, %v1469
    %v1835 = vpack.c.b16 %v1472, %v1471
    %v1836 = vpack.c.b16 %v1474, %v1473
    %v1837 = vpack.c.b16 %v1476, %v1475
    %v1838 = vpack.c.b16 %v1478, %v1477
    %v1839 = vpack.c.b16 %v1480, %v1479
    %v1840 = vpack.c.b16 %v1482, %v1481
    %v1841 = vpack.c.b16 %v1484, %v1483
    %v1842 = vpack.c.b16 %v1486, %v1485
    %v1843 = vpack.c.b16 %v1488, %v1487
    %v1844 = vpack.c.b16 %v1490, %v1489
    %v1845 = vpack.c.b16 %v1492, %v1491
    %v1846 = vpack.c.b16 %v1494, %v1493
    %v1847 = vpack.c.b16 %v1496, %v1495
    %v1848 = vpack.c.b16 %v1498, %v1497
    %v1849 = vpack.c.b16 %v1500, %v1499
    %v1850 = vpack.c.b16 %v1502, %v1501
    %v1851 = vpack.c.b16 %v1504, %v1503
    %v1852 = vpack.c.b16 %v1506, %v1505
    %v1853 = vpack.c.b16 %v1508, %v1507
    %v1854 = vpack.c.b16 %v1510, %v1509
    %v1855 = vpack.c.b16 %v1512, %v1511
    %v1856 = vpack.c.b16 %v1514, %v1513
    %v1857 = vpack.c.b16 %v1516, %v1515
    %v1858 = vpack.c.b16 %v1518, %v1517
    %v1859 = vpack.c.b16 %v1520, %v1519
    %v1860 = vpack.c.b16 %v1522, %v1521
    %v1861 = vpack.c.b16 %v1524, %v1523
    %v1862 = vpack.c.b16 %v1526, %v1525
    %v1863 = vpack.c.b16 %v1528, %v1527
    %v1864 = vpack.c.b16 %v1530, %v1529
    %v1865 = vpack.c.b16 %v1532, %v1531
    %v1866 = vpack.c.b16 %v1534, %v1533
    %v1867 = vpack.c.b16 %v1536, %v1535
    %v1868 = vpack.c.b16 %v1538, %v1537
    %v1869 = vpack.c.b16 %v1540, %v1539
    %v1870 = vpack.c.b16 %v1542, %v1541
    %v1871 = vpack.c.b16 %v1544, %v1543
    %v1872 = vpack.c.b16 %v1546, %v1545
    %v1873 = vpack.c.b16 %v1548, %v1547
    %v1874 = vpack.c.b16 %v1550, %v1549
    %v1875 = vpack.c.b16 %v1552, %v1551
    %v1876 = vpack.c.b16 %v1554, %v1553
    %v1877 = vpack.c.b16 %v1556, %v1555
    %v1878 = vpack.c.b16 %v1558, %v1557
    %v1879 = vpack.c.b16 %v1560, %v1559
    %v1880 = vpack.c.b16 %v1562, %v1561
    %v1881 = vpack.c.b16 %v1564, %v1563
    %v1882 = vpack.c.b16 %v1566, %v1565
    %v1883 = vpack.c.b16 %v1568, %v1567
    %v1884 = vpack.c.b16 %v1570, %v1569
    %v1885 = vpack.c.b16 %v1572, %v1571
    %v1886 = vpack.c.b16 %v1574, %v1573
    %v1887 = vpack.c.b16 %v1576, %v1575
    %v1888 = vpack.c.b16 %v1578, %v1577
    %v1889 = vpack.c.b16 %v1580, %v1579
    %v1890 = vpack.c.b16 %v1582, %v1581
    %v1891 = vpack.c.b16 %v1584, %v1583
    %v1892 = vpack.c.b16 %v1586, %v1585
    %v1893 = vpack.c.b16 %v1588, %v1587
    %v1894 = vpack.c.b16 %v1590, %v1589
    %v1895 = vpack.c.b16 %v1592, %v1591
    %v1896 = vpack.c.b16 %v1594, %v1593
    %v1897 = vpack.c.b16 %v1596, %v1595
    %v1898 = vpack.c.b16 %v1598, %v1597
    %v1899 = vpack.c.b16 %v1600, %v1599
    %v1900 = vpack.c.b16 %v1602, %v1601
    %v1901 = vpack.c.b16 %v1604, %v1603
    %v1902 = vpack.c.b16 %v1606, %v1605
    %v1903 = vpack.c.b16 %v1608, %v1607
    %v1904 = vpack.c.b16 %v1610, %v1609
    %v1905 = vpack.c.b16 %v1612, %v1611
    %v1906 = vpack.c.b16 %v1614, %v1613
    %v1907 = vpack.c.b16 %v1616, %v1615
    %v1908 = vpack.c.b16 %v1618, %v1617
    %v1909 = vpack.c.b16 %v1620, %v1619
    %v1910 = vpack.c.b16 %v1622, %v1621
    %v1911 = vpack.c.b16 %v1624, %v1623
    %v1912 = vpack.c.b16 %v1626, %v1625
    %v1913 = vpack.c.b16 %v1628, %v1627
    %v1914 = vpack.c.b16 %v1630, %v1629
    %v1915 = vpack.c.b16 %v1632, %v1631
    %v1916 = vpack.c.b16 %v1634, %v1633
    %v1917 = vpack.c.b16 %v1636, %v1635
    %v1918 = vpack.c.b16 %v1638, %v1637
    %v1919 = vpack.c.b16 %v1640, %v1639
    %v1920 = vpack.c.b16 %v1642, %v1641
    %v1921 = vpack.c.b16 %v1644, %v1643
    %v1922 = vpack.c.b16 %v1646, %v1645
    %v1923 = vpack.c.b16 %v1648, %v1647
    %v1924 = vpack.c.b16 %v1650, %v1649
    %v1925 = vpack.c.b16 %v1652, %v1651
    %v1926 = vpack.c.b16 %v1654, %v1653
    %v1927 = vpack.c.b16 %v1656, %v1655
    %v1928 = vpack.c.b16 %v1658, %v1657
    %v1929 = vpack.c.b16 %v1660, %v1659
    %v1930 = vpack.c.b16 %v1662, %v1661
    %v1931 = vpack.c.b16 %v1664, %v1663
    %v1932 = vpack.c.b16 %v1666, %v1665
    %v1933 = vpack.c.b16 %v1668, %v1667
    %v1934 = vpack.c.b16 %v1670, %v1669
    %v1935 = vpack.c.b16 %v1672, %v1671
    %v1936 = vpack.c.b16 %v1674, %v1673
    %v1937 = vpack.c.b16 %v1676, %v1675
    %v1938 = vpack.c.b16 %v1678, %v1677
    %v1939 = vpack.c.b16 %v1680, %v1679
    %v1940 = vpack.c.b16 %v1682, %v1681
    %v1941 = vpack.c.b16 %v1684, %v1683
    %v1942 = vpack.c.b16 %v1686, %v1685
    %2199 = vmatprep.subr.bf16.mxu0 0
    %2200 = vmatpush1.bf16.msra.mxu0 %v1694
    %2201 = vmatprep.subr.bf16.mxu0 0
    %2202 = vmatpush1.bf16.msra.mxu0 %v1693
    %2203 = vmatprep.subr.bf16.mxu0 0
    %2204 = vmatpush1.bf16.msra.mxu0 %v1692
    %2205 = vmatprep.subr.bf16.mxu0 0
    %2206 = vmatpush1.bf16.msra.mxu0 %v1691
    %2207 = vmatprep.subr.bf16.mxu0 0
    %2208 = vmatpush1.bf16.msra.mxu0 %v1690
    %2209 = vmatprep.subr.bf16.mxu0 0
    %2210 = vmatpush1.bf16.msra.mxu0 %v1689
    %2211 = vmatprep.subr.bf16.mxu0 0
    %2212 = vmatpush1.bf16.msra.mxu0 %v1688
    %2213 = vmatprep.subr.bf16.mxu0 0
    %2214 = vmatpush1.bf16.msra.mxu0 %v1687
    %2215 = vmatprep.subr.bf16.mxu0 0
    %2216 = vmatpush2.bf16.msra.mxu0 %v1702
    %2217 = vmatprep.subr.bf16.mxu0 0
    %2218 = vmatpush2.bf16.msra.mxu0 %v1701
    %2219 = vmatprep.subr.bf16.mxu0 0
    %2220 = vmatpush2.bf16.msra.mxu0 %v1700
    %2221 = vmatprep.subr.bf16.mxu0 0
    %2222 = vmatpush2.bf16.msra.mxu0 %v1699
    %2223 = vmatprep.subr.bf16.mxu0 0
    %2224 = vmatpush2.bf16.msra.mxu0 %v1698
    %2225 = vmatprep.subr.bf16.mxu0 0
    %2226 = vmatpush2.bf16.msra.mxu0 %v1697
    %2227 = vmatprep.subr.bf16.mxu0 0
    %2228 = vmatpush2.bf16.msra.mxu0 %v1696
    %2229 = vmatprep.subr.bf16.mxu0 0
    %2230 = vmatpush2.bf16.msra.mxu0 %v1695
    %2231 = vmatprep.mubr.bf16.mxu0 %v113
    %2232 = vmatmul.mubr.bf16.gmra.mxu0 %v112
    %v2233 = vpop.f32.mrf.mxu0
    %v2234 = vadd.f32 %v661, %v2233
    %v2235 = vpop.f32.mrf.mxu0
    %v2236 = vpop.f32.mrf.mxu0
    %v2237 = vpop.f32.mrf.mxu0
    %2238 = vdwg.mxu0
    %2239 = vmatprep.subr.bf16.mxu0 0
    %2240 = vmatpush1.bf16.msra.mxu0 %v1710
    %2241 = vmatprep.subr.bf16.mxu0 0
    %2242 = vmatpush1.bf16.msra.mxu0 %v1709
    %2243 = vmatprep.subr.bf16.mxu0 0
    %2244 = vmatpush1.bf16.msra.mxu0 %v1708
    %2245 = vmatprep.subr.bf16.mxu0 0
    %2246 = vmatpush1.bf16.msra.mxu0 %v1707
    %2247 = vmatprep.subr.bf16.mxu0 0
    %2248 = vmatpush1.bf16.msra.mxu0 %v1706
    %2249 = vmatprep.subr.bf16.mxu0 0
    %2250 = vmatpush1.bf16.msra.mxu0 %v1705
    %2251 = vmatprep.subr.bf16.mxu0 0
    %2252 = vmatpush1.bf16.msra.mxu0 %v1704
    %2253 = vmatprep.subr.bf16.mxu0 0
    %2254 = vmatpush1.bf16.msra.mxu0 %v1703
    %2255 = vmatprep.subr.bf16.mxu0 0
    %2256 = vmatpush2.bf16.msra.mxu0 %v1718
    %2257 = vmatprep.subr.bf16.mxu0 0
    %2258 = vmatpush2.bf16.msra.mxu0 %v1717
    %2259 = vmatprep.subr.bf16.mxu0 0
    %2260 = vmatpush2.bf16.msra.mxu0 %v1716
    %2261 = vmatprep.subr.bf16.mxu0 0
    %2262 = vmatpush2.bf16.msra.mxu0 %v1715
    %2263 = vmatprep.subr.bf16.mxu0 0
    %2264 = vmatpush2.bf16.msra.mxu0 %v1714
    %2265 = vmatprep.subr.bf16.mxu0 0
    %2266 = vmatpush2.bf16.msra.mxu0 %v1713
    %2267 = vmatprep.subr.bf16.mxu0 0
    %2268 = vmatpush2.bf16.msra.mxu0 %v1712
    %2269 = vmatprep.subr.bf16.mxu0 0
    %2270 = vmatpush2.bf16.msra.mxu0 %v1711
    %2271 = vmatprep.mubr.bf16.mxu0 %v115
    %2272 = vmatmul.mubr.bf16.gmra.mxu0 %v114
    %v2273 = vpop.f32.mrf.mxu0
    %v2274 = vadd.f32 %v2234, %v2273
    %v2275 = vpop.f32.mrf.mxu0
    %v2276 = vpop.f32.mrf.mxu0
    %v2277 = vpop.f32.mrf.mxu0
    %2278 = vdwg.mxu0
    %2279 = vmatprep.subr.bf16.mxu0 0
    %2280 = vmatpush1.bf16.msra.mxu0 %v1726
    %2281 = vmatprep.subr.bf16.mxu0 0
    %2282 = vmatpush1.bf16.msra.mxu0 %v1725
    %2283 = vmatprep.subr.bf16.mxu0 0
    %2284 = vmatpush1.bf16.msra.mxu0 %v1724
    %2285 = vmatprep.subr.bf16.mxu0 0
    %2286 = vmatpush1.bf16.msra.mxu0 %v1723
    %2287 = vmatprep.subr.bf16.mxu0 0
    %2288 = vmatpush1.bf16.msra.mxu0 %v1722
    %2289 = vmatprep.subr.bf16.mxu0 0
    %2290 = vmatpush1.bf16.msra.mxu0 %v1721
    %2291 = vmatprep.subr.bf16.mxu0 0
    %2292 = vmatpush1.bf16.msra.mxu0 %v1720
    %2293 = vmatprep.subr.bf16.mxu0 0
    %2294 = vmatpush1.bf16.msra.mxu0 %v1719
    %2295 = vmatprep.subr.bf16.mxu0 0
    %2296 = vmatpush2.bf16.msra.mxu0 %v1734
    %2297 = vmatprep.subr.bf16.mxu0 0
    %2298 = vmatpush2.bf16.msra.mxu0 %v1733
    %2299 = vmatprep.subr.bf16.mxu0 0
    %2300 = vmatpush2.bf16.msra.mxu0 %v1732
    %2301 = vmatprep.subr.bf16.mxu0 0
    %2302 = vmatpush2.bf16.msra.mxu0 %v1731
    %2303 = vmatprep.subr.bf16.mxu0 0
    %2304 = vmatpush2.bf16.msra.mxu0 %v1730
    %2305 = vmatprep.subr.bf16.mxu0 0
    %2306 = vmatpush2.bf16.msra.mxu0 %v1729
    %2307 = vmatprep.subr.bf16.mxu0 0
    %2308 = vmatpush2.bf16.msra.mxu0 %v1728
    %2309 = vmatprep.subr.bf16.mxu0 0
    %2310 = vmatpush2.bf16.msra.mxu0 %v1727
    %2311 = vmatprep.mubr.bf16.mxu0 %v117
    %2312 = vmatmul.mubr.bf16.gmra.mxu0 %v116
    %v2313 = vpop.f32.mrf.mxu0
    %v2314 = vadd.f32 %v2274, %v2313
    %v2315 = vpop.f32.mrf.mxu0
    %v2316 = vpop.f32.mrf.mxu0
    %v2317 = vpop.f32.mrf.mxu0
    %2318 = vdwg.mxu0
    %2319 = vmatprep.subr.bf16.mxu0 0
    %2320 = vmatpush1.bf16.msra.mxu0 %v1742
    %2321 = vmatprep.subr.bf16.mxu0 0
    %2322 = vmatpush1.bf16.msra.mxu0 %v1741
    %2323 = vmatprep.subr.bf16.mxu0 0
    %2324 = vmatpush1.bf16.msra.mxu0 %v1740
    %2325 = vmatprep.subr.bf16.mxu0 0
    %2326 = vmatpush1.bf16.msra.mxu0 %v1739
    %2327 = vmatprep.subr.bf16.mxu0 0
    %2328 = vmatpush1.bf16.msra.mxu0 %v1738
    %2329 = vmatprep.subr.bf16.mxu0 0
    %2330 = vmatpush1.bf16.msra.mxu0 %v1737
    %2331 = vmatprep.subr.bf16.mxu0 0
    %2332 = vmatpush1.bf16.msra.mxu0 %v1736
    %2333 = vmatprep.subr.bf16.mxu0 0
    %2334 = vmatpush1.bf16.msra.mxu0 %v1735
    %2335 = vmatprep.subr.bf16.mxu0 0
    %2336 = vmatpush2.bf16.msra.mxu0 %v1750
    %2337 = vmatprep.subr.bf16.mxu0 0
    %2338 = vmatpush2.bf16.msra.mxu0 %v1749
    %2339 = vmatprep.subr.bf16.mxu0 0
    %2340 = vmatpush2.bf16.msra.mxu0 %v1748
    %2341 = vmatprep.subr.bf16.mxu0 0
    %2342 = vmatpush2.bf16.msra.mxu0 %v1747
    %2343 = vmatprep.subr.bf16.mxu0 0
    %2344 = vmatpush2.bf16.msra.mxu0 %v1746
    %2345 = vmatprep.subr.bf16.mxu0 0
    %2346 = vmatpush2.bf16.msra.mxu0 %v1745
    %2347 = vmatprep.subr.bf16.mxu0 0
    %2348 = vmatpush2.bf16.msra.mxu0 %v1744
    %2349 = vmatprep.subr.bf16.mxu0 0
    %2350 = vmatpush2.bf16.msra.mxu0 %v1743
    %2351 = vmatprep.mubr.bf16.mxu0 %v119
    %2352 = vmatmul.mubr.bf16.gmra.mxu0 %v118
    %v2353 = vpop.f32.mrf.mxu0
    %v2354 = vadd.f32 %v2314, %v2353
    %v2355 = vpop.f32.mrf.mxu0
    %v2356 = vpop.f32.mrf.mxu0
    %v2357 = vpop.f32.mrf.mxu0
    %2358 = vdwg.mxu0
    %2359 = vmatprep.subr.bf16.mxu0 0
    %2360 = vmatpush1.bf16.msra.mxu0 %v1758
    %2361 = vmatprep.subr.bf16.mxu0 0
    %2362 = vmatpush1.bf16.msra.mxu0 %v1757
    %2363 = vmatprep.subr.bf16.mxu0 0
    %2364 = vmatpush1.bf16.msra.mxu0 %v1756
    %2365 = vmatprep.subr.bf16.mxu0 0
    %2366 = vmatpush1.bf16.msra.mxu0 %v1755
    %2367 = vmatprep.subr.bf16.mxu0 0
    %2368 = vmatpush1.bf16.msra.mxu0 %v1754
    %2369 = vmatprep.subr.bf16.mxu0 0
    %2370 = vmatpush1.bf16.msra.mxu0 %v1753
    %2371 = vmatprep.subr.bf16.mxu0 0
    %2372 = vmatpush1.bf16.msra.mxu0 %v1752
    %2373 = vmatprep.subr.bf16.mxu0 0
    %2374 = vmatpush1.bf16.msra.mxu0 %v1751
    %2375 = vmatprep.subr.bf16.mxu0 0
    %2376 = vmatpush2.bf16.msra.mxu0 %v1766
    %2377 = vmatprep.subr.bf16.mxu0 0
    %2378 = vmatpush2.bf16.msra.mxu0 %v1765
    %2379 = vmatprep.subr.bf16.mxu0 0
    %2380 = vmatpush2.bf16.msra.mxu0 %v1764
    %2381 = vmatprep.subr.bf16.mxu0 0
    %2382 = vmatpush2.bf16.msra.mxu0 %v1763
    %2383 = vmatprep.subr.bf16.mxu0 0
    %2384 = vmatpush2.bf16.msra.mxu0 %v1762
    %2385 = vmatprep.subr.bf16.mxu0 0
    %2386 = vmatpush2.bf16.msra.mxu0 %v1761
    %2387 = vmatprep.subr.bf16.mxu0 0
    %2388 = vmatpush2.bf16.msra.mxu0 %v1760
    %2389 = vmatprep.subr.bf16.mxu0 0
    %2390 = vmatpush2.bf16.msra.mxu0 %v1759
    %2391 = vmatprep.mubr.bf16.mxu0 %v121
    %2392 = vmatmul.mubr.bf16.gmra.mxu0 %v120
    %v2393 = vpop.f32.mrf.mxu0
    %v2394 = vadd.f32 %v2354, %v2393
    %v2395 = vpop.f32.mrf.mxu0
    %v2396 = vpop.f32.mrf.mxu0
    %v2397 = vpop.f32.mrf.mxu0
    %2398 = vdwg.mxu0
    %2399 = vmatprep.subr.bf16.mxu0 0
    %2400 = vmatpush1.bf16.msra.mxu0 %v1774
    %2401 = vmatprep.subr.bf16.mxu0 0
    %2402 = vmatpush1.bf16.msra.mxu0 %v1773
    %2403 = vmatprep.subr.bf16.mxu0 0
    %2404 = vmatpush1.bf16.msra.mxu0 %v1772
    %2405 = vmatprep.subr.bf16.mxu0 0
    %2406 = vmatpush1.bf16.msra.mxu0 %v1771
    %2407 = vmatprep.subr.bf16.mxu0 0
    %2408 = vmatpush1.bf16.msra.mxu0 %v1770
    %2409 = vmatprep.subr.bf16.mxu0 0
    %2410 = vmatpush1.bf16.msra.mxu0 %v1769
    %2411 = vmatprep.subr.bf16.mxu0 0
    %2412 = vmatpush1.bf16.msra.mxu0 %v1768
    %2413 = vmatprep.subr.bf16.mxu0 0
    %2414 = vmatpush1.bf16.msra.mxu0 %v1767
    %2415 = vmatprep.subr.bf16.mxu0 0
    %2416 = vmatpush2.bf16.msra.mxu0 %v1782
    %2417 = vmatprep.subr.bf16.mxu0 0
    %2418 = vmatpush2.bf16.msra.mxu0 %v1781
    %2419 = vmatprep.subr.bf16.mxu0 0
    %2420 = vmatpush2.bf16.msra.mxu0 %v1780
    %2421 = vmatprep.subr.bf16.mxu0 0
    %2422 = vmatpush2.bf16.msra.mxu0 %v1779
    %2423 = vmatprep.subr.bf16.mxu0 0
    %2424 = vmatpush2.bf16.msra.mxu0 %v1778
    %2425 = vmatprep.subr.bf16.mxu0 0
    %2426 = vmatpush2.bf16.msra.mxu0 %v1777
    %2427 = vmatprep.subr.bf16.mxu0 0
    %2428 = vmatpush2.bf16.msra.mxu0 %v1776
    %2429 = vmatprep.subr.bf16.mxu0 0
    %2430 = vmatpush2.bf16.msra.mxu0 %v1775
    %2431 = vmatprep.mubr.bf16.mxu0 %v123
    %2432 = vmatmul.mubr.bf16.gmra.mxu0 %v122
    %v2433 = vpop.f32.mrf.mxu0
    %v2434 = vadd.f32 %v2394, %v2433
    %v2435 = vpop.f32.mrf.mxu0
    %v2436 = vpop.f32.mrf.mxu0
    %v2437 = vpop.f32.mrf.mxu0
    %2438 = vdwg.mxu0
    %2439 = vmatprep.subr.bf16.mxu0 0
    %2440 = vmatpush1.bf16.msra.mxu0 %v1790
    %2441 = vmatprep.subr.bf16.mxu0 0
    %2442 = vmatpush1.bf16.msra.mxu0 %v1789
    %2443 = vmatprep.subr.bf16.mxu0 0
    %2444 = vmatpush1.bf16.msra.mxu0 %v1788
    %2445 = vmatprep.subr.bf16.mxu0 0
    %2446 = vmatpush1.bf16.msra.mxu0 %v1787
    %2447 = vmatprep.subr.bf16.mxu0 0
    %2448 = vmatpush1.bf16.msra.mxu0 %v1786
    %2449 = vmatprep.subr.bf16.mxu0 0
    %2450 = vmatpush1.bf16.msra.mxu0 %v1785
    %2451 = vmatprep.subr.bf16.mxu0 0
    %2452 = vmatpush1.bf16.msra.mxu0 %v1784
    %2453 = vmatprep.subr.bf16.mxu0 0
    %2454 = vmatpush1.bf16.msra.mxu0 %v1783
    %2455 = vmatprep.subr.bf16.mxu0 0
    %2456 = vmatpush2.bf16.msra.mxu0 %v1798
    %2457 = vmatprep.subr.bf16.mxu0 0
    %2458 = vmatpush2.bf16.msra.mxu0 %v1797
    %2459 = vmatprep.subr.bf16.mxu0 0
    %2460 = vmatpush2.bf16.msra.mxu0 %v1796
    %2461 = vmatprep.subr.bf16.mxu0 0
    %2462 = vmatpush2.bf16.msra.mxu0 %v1795
    %2463 = vmatprep.subr.bf16.mxu0 0
    %2464 = vmatpush2.bf16.msra.mxu0 %v1794
    %2465 = vmatprep.subr.bf16.mxu0 0
    %2466 = vmatpush2.bf16.msra.mxu0 %v1793
    %2467 = vmatprep.subr.bf16.mxu0 0
    %2468 = vmatpush2.bf16.msra.mxu0 %v1792
    %2469 = vmatprep.subr.bf16.mxu0 0
    %2470 = vmatpush2.bf16.msra.mxu0 %v1791
    %2471 = vmatprep.mubr.bf16.mxu0 %v125
    %2472 = vmatmul.mubr.bf16.gmra.mxu0 %v124
    %v2473 = vpop.f32.mrf.mxu0
    %v2474 = vadd.f32 %v2434, %v2473
    %v2475 = vpop.f32.mrf.mxu0
    %v2476 = vpop.f32.mrf.mxu0
    %v2477 = vpop.f32.mrf.mxu0
    %2478 = vdwg.mxu0
    %2479 = vmatprep.subr.bf16.mxu0 0
    %2480 = vmatpush1.bf16.msra.mxu0 %v1806
    %2481 = vmatprep.subr.bf16.mxu0 0
    %2482 = vmatpush1.bf16.msra.mxu0 %v1805
    %2483 = vmatprep.subr.bf16.mxu0 0
    %2484 = vmatpush1.bf16.msra.mxu0 %v1804
    %2485 = vmatprep.subr.bf16.mxu0 0
    %2486 = vmatpush1.bf16.msra.mxu0 %v1803
    %2487 = vmatprep.subr.bf16.mxu0 0
    %2488 = vmatpush1.bf16.msra.mxu0 %v1802
    %2489 = vmatprep.subr.bf16.mxu0 0
    %2490 = vmatpush1.bf16.msra.mxu0 %v1801
    %2491 = vmatprep.subr.bf16.mxu0 0
    %2492 = vmatpush1.bf16.msra.mxu0 %v1800
    %2493 = vmatprep.subr.bf16.mxu0 0
    %2494 = vmatpush1.bf16.msra.mxu0 %v1799
    %2495 = vmatprep.subr.bf16.mxu0 0
    %2496 = vmatpush2.bf16.msra.mxu0 %v1814
    %2497 = vmatprep.subr.bf16.mxu0 0
    %2498 = vmatpush2.bf16.msra.mxu0 %v1813
    %2499 = vmatprep.subr.bf16.mxu0 0
    %2500 = vmatpush2.bf16.msra.mxu0 %v1812
    %2501 = vmatprep.subr.bf16.mxu0 0
    %2502 = vmatpush2.bf16.msra.mxu0 %v1811
    %2503 = vmatprep.subr.bf16.mxu0 0
    %2504 = vmatpush2.bf16.msra.mxu0 %v1810
    %2505 = vmatprep.subr.bf16.mxu0 0
    %2506 = vmatpush2.bf16.msra.mxu0 %v1809
    %2507 = vmatprep.subr.bf16.mxu0 0
    %2508 = vmatpush2.bf16.msra.mxu0 %v1808
    %2509 = vmatprep.subr.bf16.mxu0 0
    %2510 = vmatpush2.bf16.msra.mxu0 %v1807
    %2511 = vmatprep.mubr.bf16.mxu0 %v127
    %2512 = vmatmul.mubr.bf16.gmra.mxu0 %v126
    %v2513 = vpop.f32.mrf.mxu0
    %v2514 = vadd.f32 %v2474, %v2513
    %v2515 = vpop.f32.mrf.mxu0
    %v2516 = vpop.f32.mrf.mxu0
    %v2517 = vpop.f32.mrf.mxu0
    %2518 = vdwg.mxu0
    %2519 = vmatprep.subr.bf16.mxu0 0
    %2520 = vmatpush1.bf16.msra.mxu0 %v1822
    %2521 = vmatprep.subr.bf16.mxu0 0
    %2522 = vmatpush1.bf16.msra.mxu0 %v1821
    %2523 = vmatprep.subr.bf16.mxu0 0
    %2524 = vmatpush1.bf16.msra.mxu0 %v1820
    %2525 = vmatprep.subr.bf16.mxu0 0
    %2526 = vmatpush1.bf16.msra.mxu0 %v1819
    %2527 = vmatprep.subr.bf16.mxu0 0
    %2528 = vmatpush1.bf16.msra.mxu0 %v1818
    %2529 = vmatprep.subr.bf16.mxu0 0
    %2530 = vmatpush1.bf16.msra.mxu0 %v1817
    %2531 = vmatprep.subr.bf16.mxu0 0
    %2532 = vmatpush1.bf16.msra.mxu0 %v1816
    %2533 = vmatprep.subr.bf16.mxu0 0
    %2534 = vmatpush1.bf16.msra.mxu0 %v1815
    %2535 = vmatprep.subr.bf16.mxu0 0
    %2536 = vmatpush2.bf16.msra.mxu0 %v1830
    %2537 = vmatprep.subr.bf16.mxu0 0
    %2538 = vmatpush2.bf16.msra.mxu0 %v1829
    %2539 = vmatprep.subr.bf16.mxu0 0
    %2540 = vmatpush2.bf16.msra.mxu0 %v1828
    %2541 = vmatprep.subr.bf16.mxu0 0
    %2542 = vmatpush2.bf16.msra.mxu0 %v1827
    %2543 = vmatprep.subr.bf16.mxu0 0
    %2544 = vmatpush2.bf16.msra.mxu0 %v1826
    %2545 = vmatprep.subr.bf16.mxu0 0
    %2546 = vmatpush2.bf16.msra.mxu0 %v1825
    %2547 = vmatprep.subr.bf16.mxu0 0
    %2548 = vmatpush2.bf16.msra.mxu0 %v1824
    %2549 = vmatprep.subr.bf16.mxu0 0
    %2550 = vmatpush2.bf16.msra.mxu0 %v1823
    %2551 = vmatprep.mubr.bf16.mxu0 %v129
    %2552 = vmatmul.mubr.bf16.gmra.mxu0 %v128
    %v2553 = vpop.f32.mrf.mxu0
    %v2554 = vadd.f32 %v2514, %v2553
    %v2555 = vpop.f32.mrf.mxu0
    %v2556 = vpop.f32.mrf.mxu0
    %v2557 = vpop.f32.mrf.mxu0
    %2558 = vdwg.mxu0
    %2559 = vmatprep.subr.bf16.mxu0 0
    %2560 = vmatpush1.bf16.msra.mxu0 %v1838
    %2561 = vmatprep.subr.bf16.mxu0 0
    %2562 = vmatpush1.bf16.msra.mxu0 %v1837
    %2563 = vmatprep.subr.bf16.mxu0 0
    %2564 = vmatpush1.bf16.msra.mxu0 %v1836
    %2565 = vmatprep.subr.bf16.mxu0 0
    %2566 = vmatpush1.bf16.msra.mxu0 %v1835
    %2567 = vmatprep.subr.bf16.mxu0 0
    %2568 = vmatpush1.bf16.msra.mxu0 %v1834
    %2569 = vmatprep.subr.bf16.mxu0 0
    %2570 = vmatpush1.bf16.msra.mxu0 %v1833
    %2571 = vmatprep.subr.bf16.mxu0 0
    %2572 = vmatpush1.bf16.msra.mxu0 %v1832
    %2573 = vmatprep.subr.bf16.mxu0 0
    %2574 = vmatpush1.bf16.msra.mxu0 %v1831
    %2575 = vmatprep.subr.bf16.mxu0 0
    %2576 = vmatpush2.bf16.msra.mxu0 %v1846
    %2577 = vmatprep.subr.bf16.mxu0 0
    %2578 = vmatpush2.bf16.msra.mxu0 %v1845
    %2579 = vmatprep.subr.bf16.mxu0 0
    %2580 = vmatpush2.bf16.msra.mxu0 %v1844
    %2581 = vmatprep.subr.bf16.mxu0 0
    %2582 = vmatpush2.bf16.msra.mxu0 %v1843
    %2583 = vmatprep.subr.bf16.mxu0 0
    %2584 = vmatpush2.bf16.msra.mxu0 %v1842
    %2585 = vmatprep.subr.bf16.mxu0 0
    %2586 = vmatpush2.bf16.msra.mxu0 %v1841
    %2587 = vmatprep.subr.bf16.mxu0 0
    %2588 = vmatpush2.bf16.msra.mxu0 %v1840
    %2589 = vmatprep.subr.bf16.mxu0 0
    %2590 = vmatpush2.bf16.msra.mxu0 %v1839
    %2591 = vmatprep.mubr.bf16.mxu0 %v131
    %2592 = vmatmul.mubr.bf16.gmra.mxu0 %v130
    %v2593 = vpop.f32.mrf.mxu0
    %v2594 = vadd.f32 %v2554, %v2593
    %v2595 = vpop.f32.mrf.mxu0
    %v2596 = vpop.f32.mrf.mxu0
    %v2597 = vpop.f32.mrf.mxu0
    %2598 = vdwg.mxu0
    %2599 = vmatprep.subr.bf16.mxu0 0
    %2600 = vmatpush1.bf16.msra.mxu0 %v1854
    %2601 = vmatprep.subr.bf16.mxu0 0
    %2602 = vmatpush1.bf16.msra.mxu0 %v1853
    %2603 = vmatprep.subr.bf16.mxu0 0
    %2604 = vmatpush1.bf16.msra.mxu0 %v1852
    %2605 = vmatprep.subr.bf16.mxu0 0
    %2606 = vmatpush1.bf16.msra.mxu0 %v1851
    %2607 = vmatprep.subr.bf16.mxu0 0
    %2608 = vmatpush1.bf16.msra.mxu0 %v1850
    %2609 = vmatprep.subr.bf16.mxu0 0
    %2610 = vmatpush1.bf16.msra.mxu0 %v1849
    %2611 = vmatprep.subr.bf16.mxu0 0
    %2612 = vmatpush1.bf16.msra.mxu0 %v1848
    %2613 = vmatprep.subr.bf16.mxu0 0
    %2614 = vmatpush1.bf16.msra.mxu0 %v1847
    %2615 = vmatprep.subr.bf16.mxu0 0
    %2616 = vmatpush2.bf16.msra.mxu0 %v1862
    %2617 = vmatprep.subr.bf16.mxu0 0
    %2618 = vmatpush2.bf16.msra.mxu0 %v1861
    %2619 = vmatprep.subr.bf16.mxu0 0
    %2620 = vmatpush2.bf16.msra.mxu0 %v1860
    %2621 = vmatprep.subr.bf16.mxu0 0
    %2622 = vmatpush2.bf16.msra.mxu0 %v1859
    %2623 = vmatprep.subr.bf16.mxu0 0
    %2624 = vmatpush2.bf16.msra.mxu0 %v1858
    %2625 = vmatprep.subr.bf16.mxu0 0
    %2626 = vmatpush2.bf16.msra.mxu0 %v1857
    %2627 = vmatprep.subr.bf16.mxu0 0
    %2628 = vmatpush2.bf16.msra.mxu0 %v1856
    %2629 = vmatprep.subr.bf16.mxu0 0
    %2630 = vmatpush2.bf16.msra.mxu0 %v1855
    %2631 = vmatprep.mubr.bf16.mxu0 %v133
    %2632 = vmatmul.mubr.bf16.gmra.mxu0 %v132
    %v2633 = vpop.f32.mrf.mxu0
    %v2634 = vadd.f32 %v2594, %v2633
    %v2635 = vpop.f32.mrf.mxu0
    %v2636 = vpop.f32.mrf.mxu0
    %v2637 = vpop.f32.mrf.mxu0
    %2638 = vdwg.mxu0
    %2639 = vmatprep.subr.bf16.mxu0 0
    %2640 = vmatpush1.bf16.msra.mxu0 %v1870
    %2641 = vmatprep.subr.bf16.mxu0 0
    %2642 = vmatpush1.bf16.msra.mxu0 %v1869
    %2643 = vmatprep.subr.bf16.mxu0 0
    %2644 = vmatpush1.bf16.msra.mxu0 %v1868
    %2645 = vmatprep.subr.bf16.mxu0 0
    %2646 = vmatpush1.bf16.msra.mxu0 %v1867
    %2647 = vmatprep.subr.bf16.mxu0 0
    %2648 = vmatpush1.bf16.msra.mxu0 %v1866
    %2649 = vmatprep.subr.bf16.mxu0 0
    %2650 = vmatpush1.bf16.msra.mxu0 %v1865
    %2651 = vmatprep.subr.bf16.mxu0 0
    %2652 = vmatpush1.bf16.msra.mxu0 %v1864
    %2653 = vmatprep.subr.bf16.mxu0 0
    %2654 = vmatpush1.bf16.msra.mxu0 %v1863
    %2655 = vmatprep.subr.bf16.mxu0 0
    %2656 = vmatpush2.bf16.msra.mxu0 %v1878
    %2657 = vmatprep.subr.bf16.mxu0 0
    %2658 = vmatpush2.bf16.msra.mxu0 %v1877
    %2659 = vmatprep.subr.bf16.mxu0 0
    %2660 = vmatpush2.bf16.msra.mxu0 %v1876
    %2661 = vmatprep.subr.bf16.mxu0 0
    %2662 = vmatpush2.bf16.msra.mxu0 %v1875
    %2663 = vmatprep.subr.bf16.mxu0 0
    %2664 = vmatpush2.bf16.msra.mxu0 %v1874
    %2665 = vmatprep.subr.bf16.mxu0 0
    %2666 = vmatpush2.bf16.msra.mxu0 %v1873
    %2667 = vmatprep.subr.bf16.mxu0 0
    %2668 = vmatpush2.bf16.msra.mxu0 %v1872
    %2669 = vmatprep.subr.bf16.mxu0 0
    %2670 = vmatpush2.bf16.msra.mxu0 %v1871
    %2671 = vmatprep.mubr.bf16.mxu0 %v135
    %2672 = vmatmul.mubr.bf16.gmra.mxu0 %v134
    %v2673 = vpop.f32.mrf.mxu0
    %v2674 = vadd.f32 %v2634, %v2673
    %v2675 = vpop.f32.mrf.mxu0
    %v2676 = vpop.f32.mrf.mxu0
    %v2677 = vpop.f32.mrf.mxu0
    %2678 = vdwg.mxu0
    %2679 = vmatprep.subr.bf16.mxu0 0
    %2680 = vmatpush1.bf16.msra.mxu0 %v1886
    %2681 = vmatprep.subr.bf16.mxu0 0
    %2682 = vmatpush1.bf16.msra.mxu0 %v1885
    %2683 = vmatprep.subr.bf16.mxu0 0
    %2684 = vmatpush1.bf16.msra.mxu0 %v1884
    %2685 = vmatprep.subr.bf16.mxu0 0
    %2686 = vmatpush1.bf16.msra.mxu0 %v1883
    %2687 = vmatprep.subr.bf16.mxu0 0
    %2688 = vmatpush1.bf16.msra.mxu0 %v1882
    %2689 = vmatprep.subr.bf16.mxu0 0
    %2690 = vmatpush1.bf16.msra.mxu0 %v1881
    %2691 = vmatprep.subr.bf16.mxu0 0
    %2692 = vmatpush1.bf16.msra.mxu0 %v1880
    %2693 = vmatprep.subr.bf16.mxu0 0
    %2694 = vmatpush1.bf16.msra.mxu0 %v1879
    %2695 = vmatprep.subr.bf16.mxu0 0
    %2696 = vmatpush2.bf16.msra.mxu0 %v1894
    %2697 = vmatprep.subr.bf16.mxu0 0
    %2698 = vmatpush2.bf16.msra.mxu0 %v1893
    %2699 = vmatprep.subr.bf16.mxu0 0
    %2700 = vmatpush2.bf16.msra.mxu0 %v1892
    %2701 = vmatprep.subr.bf16.mxu0 0
    %2702 = vmatpush2.bf16.msra.mxu0 %v1891
    %2703 = vmatprep.subr.bf16.mxu0 0
    %2704 = vmatpush2.bf16.msra.mxu0 %v1890
    %2705 = vmatprep.subr.bf16.mxu0 0
    %2706 = vmatpush2.bf16.msra.mxu0 %v1889
    %2707 = vmatprep.subr.bf16.mxu0 0
    %2708 = vmatpush2.bf16.msra.mxu0 %v1888
    %2709 = vmatprep.subr.bf16.mxu0 0
    %2710 = vmatpush2.bf16.msra.mxu0 %v1887
    %2711 = vmatprep.mubr.bf16.mxu0 %v137
    %2712 = vmatmul.mubr.bf16.gmra.mxu0 %v136
    %v2713 = vpop.f32.mrf.mxu0
    %v2714 = vadd.f32 %v2674, %v2713
    %v2715 = vpop.f32.mrf.mxu0
    %v2716 = vpop.f32.mrf.mxu0
    %v2717 = vpop.f32.mrf.mxu0
    %2718 = vdwg.mxu0
    %2719 = vmatprep.subr.bf16.mxu0 0
    %2720 = vmatpush1.bf16.msra.mxu0 %v1902
    %2721 = vmatprep.subr.bf16.mxu0 0
    %2722 = vmatpush1.bf16.msra.mxu0 %v1901
    %2723 = vmatprep.subr.bf16.mxu0 0
    %2724 = vmatpush1.bf16.msra.mxu0 %v1900
    %2725 = vmatprep.subr.bf16.mxu0 0
    %2726 = vmatpush1.bf16.msra.mxu0 %v1899
    %2727 = vmatprep.subr.bf16.mxu0 0
    %2728 = vmatpush1.bf16.msra.mxu0 %v1898
    %2729 = vmatprep.subr.bf16.mxu0 0
    %2730 = vmatpush1.bf16.msra.mxu0 %v1897
    %2731 = vmatprep.subr.bf16.mxu0 0
    %2732 = vmatpush1.bf16.msra.mxu0 %v1896
    %2733 = vmatprep.subr.bf16.mxu0 0
    %2734 = vmatpush1.bf16.msra.mxu0 %v1895
    %2735 = vmatprep.subr.bf16.mxu0 0
    %2736 = vmatpush2.bf16.msra.mxu0 %v1910
    %2737 = vmatprep.subr.bf16.mxu0 0
    %2738 = vmatpush2.bf16.msra.mxu0 %v1909
    %2739 = vmatprep.subr.bf16.mxu0 0
    %2740 = vmatpush2.bf16.msra.mxu0 %v1908
    %2741 = vmatprep.subr.bf16.mxu0 0
    %2742 = vmatpush2.bf16.msra.mxu0 %v1907
    %2743 = vmatprep.subr.bf16.mxu0 0
    %2744 = vmatpush2.bf16.msra.mxu0 %v1906
    %2745 = vmatprep.subr.bf16.mxu0 0
    %2746 = vmatpush2.bf16.msra.mxu0 %v1905
    %2747 = vmatprep.subr.bf16.mxu0 0
    %2748 = vmatpush2.bf16.msra.mxu0 %v1904
    %2749 = vmatprep.subr.bf16.mxu0 0
    %2750 = vmatpush2.bf16.msra.mxu0 %v1903
    %2751 = vmatprep.mubr.bf16.mxu0 %v139
    %2752 = vmatmul.mubr.bf16.gmra.mxu0 %v138
    %v2753 = vpop.f32.mrf.mxu0
    %v2754 = vadd.f32 %v2714, %v2753
    %v2755 = vpop.f32.mrf.mxu0
    %v2756 = vpop.f32.mrf.mxu0
    %v2757 = vpop.f32.mrf.mxu0
    %2758 = vdwg.mxu0
    %2759 = vmatprep.subr.bf16.mxu0 0
    %2760 = vmatpush1.bf16.msra.mxu0 %v1918
    %2761 = vmatprep.subr.bf16.mxu0 0
    %2762 = vmatpush1.bf16.msra.mxu0 %v1917
    %2763 = vmatprep.subr.bf16.mxu0 0
    %2764 = vmatpush1.bf16.msra.mxu0 %v1916
    %2765 = vmatprep.subr.bf16.mxu0 0
    %2766 = vmatpush1.bf16.msra.mxu0 %v1915
    %2767 = vmatprep.subr.bf16.mxu0 0
    %2768 = vmatpush1.bf16.msra.mxu0 %v1914
    %2769 = vmatprep.subr.bf16.mxu0 0
    %2770 = vmatpush1.bf16.msra.mxu0 %v1913
    %2771 = vmatprep.subr.bf16.mxu0 0
    %2772 = vmatpush1.bf16.msra.mxu0 %v1912
    %2773 = vmatprep.subr.bf16.mxu0 0
    %2774 = vmatpush1.bf16.msra.mxu0 %v1911
    %2775 = vmatprep.subr.bf16.mxu0 0
    %2776 = vmatpush2.bf16.msra.mxu0 %v1926
    %2777 = vmatprep.subr.bf16.mxu0 0
    %2778 = vmatpush2.bf16.msra.mxu0 %v1925
    %2779 = vmatprep.subr.bf16.mxu0 0
    %2780 = vmatpush2.bf16.msra.mxu0 %v1924
    %2781 = vmatprep.subr.bf16.mxu0 0
    %2782 = vmatpush2.bf16.msra.mxu0 %v1923
    %2783 = vmatprep.subr.bf16.mxu0 0
    %2784 = vmatpush2.bf16.msra.mxu0 %v1922
    %2785 = vmatprep.subr.bf16.mxu0 0
    %2786 = vmatpush2.bf16.msra.mxu0 %v1921
    %2787 = vmatprep.subr.bf16.mxu0 0
    %2788 = vmatpush2.bf16.msra.mxu0 %v1920
    %2789 = vmatprep.subr.bf16.mxu0 0
    %2790 = vmatpush2.bf16.msra.mxu0 %v1919
    %2791 = vmatprep.mubr.bf16.mxu0 %v141
    %2792 = vmatmul.mubr.bf16.gmra.mxu0 %v140
    %v2793 = vpop.f32.mrf.mxu0
    %v2794 = vadd.f32 %v2754, %v2793
    %v2795 = vpop.f32.mrf.mxu0
    %v2796 = vpop.f32.mrf.mxu0
    %v2797 = vpop.f32.mrf.mxu0
    %2798 = vdwg.mxu0
    %2799 = vmatprep.subr.bf16.mxu0 0
    %2800 = vmatpush1.bf16.msra.mxu0 %v1934
    %2801 = vmatprep.subr.bf16.mxu0 0
    %2802 = vmatpush1.bf16.msra.mxu0 %v1933
    %2803 = vmatprep.subr.bf16.mxu0 0
    %2804 = vmatpush1.bf16.msra.mxu0 %v1932
    %2805 = vmatprep.subr.bf16.mxu0 0
    %2806 = vmatpush1.bf16.msra.mxu0 %v1931
    %2807 = vmatprep.subr.bf16.mxu0 0
    %2808 = vmatpush1.bf16.msra.mxu0 %v1930
    %2809 = vmatprep.subr.bf16.mxu0 0
    %2810 = vmatpush1.bf16.msra.mxu0 %v1929
    %2811 = vmatprep.subr.bf16.mxu0 0
    %2812 = vmatpush1.bf16.msra.mxu0 %v1928
    %2813 = vmatprep.subr.bf16.mxu0 0
    %2814 = vmatpush1.bf16.msra.mxu0 %v1927
    %2815 = vmatprep.subr.bf16.mxu0 0
    %2816 = vmatpush2.bf16.msra.mxu0 %v1942
    %2817 = vmatprep.subr.bf16.mxu0 0
    %2818 = vmatpush2.bf16.msra.mxu0 %v1941
    %2819 = vmatprep.subr.bf16.mxu0 0
    %2820 = vmatpush2.bf16.msra.mxu0 %v1940
    %2821 = vmatprep.subr.bf16.mxu0 0
    %2822 = vmatpush2.bf16.msra.mxu0 %v1939
    %2823 = vmatprep.subr.bf16.mxu0 0
    %2824 = vmatpush2.bf16.msra.mxu0 %v1938
    %2825 = vmatprep.subr.bf16.mxu0 0
    %2826 = vmatpush2.bf16.msra.mxu0 %v1937
    %2827 = vmatprep.subr.bf16.mxu0 0
    %2828 = vmatpush2.bf16.msra.mxu0 %v1936
    %2829 = vmatprep.subr.bf16.mxu0 0
    %2830 = vmatpush2.bf16.msra.mxu0 %v1935
    %2831 = vmatprep.mubr.bf16.mxu0 %v143
    %2832 = vmatmul.mubr.bf16.gmra.mxu0 %v142
    %v2833 = vpop.f32.mrf.mxu0
    %v2834 = vadd.f32 %v2794, %v2833
    %v2835 = vpop.f32.mrf.mxu0
    %v2836 = vpop.f32.mrf.mxu0
    %v2837 = vpop.f32.mrf.mxu0
    %2838 = vdwg.mxu0
    %v2839 = vmax.f32 %v2834, 0.0
    %v2840 = vpack.c.bf16 %v2839, %v2839
    %v2841 = vld [vmem:[#allocation6] sm:$0xf]
    %v2842 = vld [vmem:[#allocation6 + $0x4] sm:$0xf]
    %v2843 = vld [vmem:[#allocation6 + $0x8] sm:$0xf]
    %v2844 = vld [vmem:[#allocation6 + $0xc] sm:$0xf]
    %v2845 = vld [vmem:[#allocation6 + $0x10] sm:$0xf]
    %v2846 = vld [vmem:[#allocation6 + $0x14] sm:$0xf]
    %v2847 = vld [vmem:[#allocation6 + $0x18] sm:$0xf]
    %v2848 = vld [vmem:[#allocation6 + $0x1c] sm:$0xf]
    %v2849 = vld [vmem:[#allocation6 + $0x20] sm:$0xf]
    %v2850 = vld [vmem:[#allocation6 + $0x24] sm:$0xf]
    %v2851 = vld [vmem:[#allocation6 + $0x28] sm:$0xf]
    %v2852 = vld [vmem:[#allocation6 + $0x2c] sm:$0xf]
    %v2853 = vld [vmem:[#allocation6 + $0x30] sm:$0xf]
    %v2854 = vld [vmem:[#allocation6 + $0x34] sm:$0xf]
    %v2855 = vld [vmem:[#allocation6 + $0x38] sm:$0xf]
    %v2856 = vld [vmem:[#allocation6 + $0x3c] sm:$0xf]
    %v2857 = vld [vmem:[%s4] sm:$0x1]
    %v2859 = vlaneseq
    %v2860 = vshrl.u32 %v2859, 7
    %v2861 = vsub.s32 0, %v2860
    %v2862 = vrot.slane %v2857, %v2861
    %v2880 = vunpack.c.l.b16 %v2841
    %v2881 = vunpack.c.l.b16 %v2842
    %v2882 = vunpack.c.l.b16 %v2843
    %v2883 = vunpack.c.l.b16 %v2844
    %v2884 = vunpack.c.l.b16 %v2845
    %v2885 = vunpack.c.l.b16 %v2846
    %v2886 = vunpack.c.l.b16 %v2847
    %v2887 = vunpack.c.l.b16 %v2848
    %v2888 = vunpack.c.l.b16 %v2849
    %v2889 = vunpack.c.l.b16 %v2850
    %v2890 = vunpack.c.l.b16 %v2851
    %v2891 = vunpack.c.l.b16 %v2852
    %v2892 = vunpack.c.l.b16 %v2853
    %v2893 = vunpack.c.l.b16 %v2854
    %v2894 = vunpack.c.l.b16 %v2855
    %v2895 = vunpack.c.l.b16 %v2856
    %v2896 = vpack.c.b16 %v2881, %v2880
    %v2897 = vpack.c.b16 %v2883, %v2882
    %v2898 = vpack.c.b16 %v2885, %v2884
    %v2899 = vpack.c.b16 %v2887, %v2886
    %v2900 = vpack.c.b16 %v2889, %v2888
    %v2901 = vpack.c.b16 %v2891, %v2890
    %v2902 = vpack.c.b16 %v2893, %v2892
    %v2903 = vpack.c.b16 %v2895, %v2894
    %2912 = vmatprep.subr.bf16.mxu0 0
    %2913 = vmatpush1.bf16.msra.mxu0 %v2903
    %2914 = vmatprep.subr.bf16.mxu0 0
    %2915 = vmatpush1.bf16.msra.mxu0 %v2902
    %2916 = vmatprep.subr.bf16.mxu0 0
    %2917 = vmatpush1.bf16.msra.mxu0 %v2901
    %2918 = vmatprep.subr.bf16.mxu0 0
    %2919 = vmatpush1.bf16.msra.mxu0 %v2900
    %2920 = vmatprep.subr.bf16.mxu0 0
    %2921 = vmatpush1.bf16.msra.mxu0 %v2899
    %2922 = vmatprep.subr.bf16.mxu0 0
    %2923 = vmatpush1.bf16.msra.mxu0 %v2898
    %2924 = vmatprep.subr.bf16.mxu0 0
    %2925 = vmatpush1.bf16.msra.mxu0 %v2897
    %2926 = vmatprep.subr.bf16.mxu0 0
    %2927 = vmatpush1.bf16.msra.mxu0 %v2896
    %2928 = vmatprep.subr.bf16.mxu0 0
    %2929 = vmatpush2.bf16.msra.mxu0 0
    %2930 = vmatprep.subr.bf16.mxu0 0
    %2931 = vmatpush2.bf16.msra.mxu0 0
    %2932 = vmatprep.subr.bf16.mxu0 0
    %2933 = vmatpush2.bf16.msra.mxu0 0
    %2934 = vmatprep.subr.bf16.mxu0 0
    %2935 = vmatpush2.bf16.msra.mxu0 0
    %2936 = vmatprep.subr.bf16.mxu0 0
    %2937 = vmatpush2.bf16.msra.mxu0 0
    %2938 = vmatprep.subr.bf16.mxu0 0
    %2939 = vmatpush2.bf16.msra.mxu0 0
    %2940 = vmatprep.subr.bf16.mxu0 0
    %2941 = vmatpush2.bf16.msra.mxu0 0
    %2942 = vmatprep.subr.bf16.mxu0 0
    %2943 = vmatpush2.bf16.msra.mxu0 0
    %2944 = vmatprep.mubr.bf16.mxu0 0
    %2945 = vmatmul.mubr.bf16.gmra.mxu0 %v2840
    %v2946 = vpop.f32.mrf.mxu0
    %v2947 = vadd.f32 %v2862, %v2946
    %v2948 = vpop.f32.mrf.mxu0
    %v2949 = vpop.f32.mrf.mxu0
    %v2950 = vpop.f32.mrf.mxu0
    %2951 = vdwg.mxu0
    %v2952 = vmax.f32 %v2947, 0.0
    %v2953 = vpack.c.bf16 %v2952, %v2952
    %v2954 = vld [vmem:[#allocation7] sm:$0xf]
    %v2955 = vld [vmem:[#allocation7 + $0x4] sm:$0xf]
    %v2956 = vld [vmem:[#allocation7 + $0x8] sm:$0xf]
    %v2957 = vld [vmem:[#allocation7 + $0xc] sm:$0xf]
    %v2958 = vld [vmem:[#allocation7 + $0x10] sm:$0xf]
    %v2959 = vld [vmem:[#allocation7 + $0x14] sm:$0xf]
    %v2960 = vld [vmem:[#allocation7 + $0x18] sm:$0xf]
    %v2961 = vld [vmem:[#allocation7 + $0x1c] sm:$0xf]
    %v2962 = vld [vmem:[#allocation7 + $0x20] sm:$0xf]
    %v2963 = vld [vmem:[#allocation7 + $0x24] sm:$0xf]
    %v2964 = vld [vmem:[#allocation7 + $0x28] sm:$0xf]
    %v2965 = vld [vmem:[#allocation7 + $0x2c] sm:$0xf]
    %v2966 = vld [vmem:[#allocation7 + $0x30] sm:$0xf]
    %v2967 = vld [vmem:[#allocation7 + $0x34] sm:$0xf]
    %v2968 = vld [vmem:[#allocation7 + $0x38] sm:$0xf]
    %v2969 = vld [vmem:[#allocation7 + $0x3c] sm:$0xf]
    %v2970 = vld [vmem:[%s6] sm:$0x1]
    %v2972 = vlaneseq
    %v2973 = vshrl.u32 %v2972, 7
    %v2974 = vsub.s32 0, %v2973
    %v2975 = vrot.slane %v2970, %v2974
    %v2993 = vunpack.c.l.b16 %v2954
    %v2994 = vunpack.c.l.b16 %v2955
    %v2995 = vunpack.c.l.b16 %v2956
    %v2996 = vunpack.c.l.b16 %v2957
    %v2997 = vunpack.c.l.b16 %v2958
    %v2998 = vunpack.c.l.b16 %v2959
    %v2999 = vunpack.c.l.b16 %v2960
    %v3000 = vunpack.c.l.b16 %v2961
    %v3001 = vunpack.c.l.b16 %v2962
    %v3002 = vunpack.c.l.b16 %v2963
    %v3003 = vunpack.c.l.b16 %v2964
    %v3004 = vunpack.c.l.b16 %v2965
    %v3005 = vunpack.c.l.b16 %v2966
    %v3006 = vunpack.c.l.b16 %v2967
    %v3007 = vunpack.c.l.b16 %v2968
    %v3008 = vunpack.c.l.b16 %v2969
    %v3009 = vpack.c.b16 %v2994, %v2993
    %v3010 = vpack.c.b16 %v2996, %v2995
    %v3011 = vpack.c.b16 %v2998, %v2997
    %v3012 = vpack.c.b16 %v3000, %v2999
    %v3013 = vpack.c.b16 %v3002, %v3001
    %v3014 = vpack.c.b16 %v3004, %v3003
    %v3015 = vpack.c.b16 %v3006, %v3005
    %v3016 = vpack.c.b16 %v3008, %v3007
    %3025 = vmatprep.subr.bf16.mxu0 0
    %3026 = vmatpush1.bf16.msra.mxu0 %v3016
    %3027 = vmatprep.subr.bf16.mxu0 0
    %3028 = vmatpush1.bf16.msra.mxu0 %v3015
    %3029 = vmatprep.subr.bf16.mxu0 0
    %3030 = vmatpush1.bf16.msra.mxu0 %v3014
    %3031 = vmatprep.subr.bf16.mxu0 0
    %3032 = vmatpush1.bf16.msra.mxu0 %v3013
    %3033 = vmatprep.subr.bf16.mxu0 0
    %3034 = vmatpush1.bf16.msra.mxu0 %v3012
    %3035 = vmatprep.subr.bf16.mxu0 0
    %3036 = vmatpush1.bf16.msra.mxu0 %v3011
    %3037 = vmatprep.subr.bf16.mxu0 0
    %3038 = vmatpush1.bf16.msra.mxu0 %v3010
    %3039 = vmatprep.subr.bf16.mxu0 0
    %3040 = vmatpush1.bf16.msra.mxu0 %v3009
    %3041 = vmatprep.subr.bf16.mxu0 0
    %3042 = vmatpush2.bf16.msra.mxu0 0
    %3043 = vmatprep.subr.bf16.mxu0 0
    %3044 = vmatpush2.bf16.msra.mxu0 0
    %3045 = vmatprep.subr.bf16.mxu0 0
    %3046 = vmatpush2.bf16.msra.mxu0 0
    %3047 = vmatprep.subr.bf16.mxu0 0
    %3048 = vmatpush2.bf16.msra.mxu0 0
    %3049 = vmatprep.subr.bf16.mxu0 0
    %3050 = vmatpush2.bf16.msra.mxu0 0
    %3051 = vmatprep.subr.bf16.mxu0 0
    %3052 = vmatpush2.bf16.msra.mxu0 0
    %3053 = vmatprep.subr.bf16.mxu0 0
    %3054 = vmatpush2.bf16.msra.mxu0 0
    %3055 = vmatprep.subr.bf16.mxu0 0
    %3056 = vmatpush2.bf16.msra.mxu0 0
    %3057 = vmatprep.mubr.bf16.mxu0 0
    %3058 = vmatmul.mubr.bf16.gmra.mxu0 %v2953
    %v3059 = vpop.f32.mrf.mxu0
    %v3060 = vadd.f32 %v2975, %v3059
    %v3061 = vpop.f32.mrf.mxu0
    %v3062 = vpop.f32.mrf.mxu0
    %v3063 = vpop.f32.mrf.mxu0
    %3064 = vdwg.mxu0
    %v3065 = vxor.u32 %v3060, 2147483648
    %v3066 = vmul.f32 %v3065, 1.442695
    %v3067 = vpow.pop %v3066
    %v3068 = vadd.f32 %v3067, 1.0
    %v3069 = vrcp.pop %v3068
    %v3070 = vmul.f32 1.0, %v3069
    %vm3071 = vcmask 7168
    %3072 = vst.msk [vmem:[%s7] sm:$0xff] %vm3071, %v3070
    // Predicated region
    $region46: #{tpu_custom_call.1} parent=1 // pred_check
      _
    $region47: #{tpu_custom_call.1} parent=1 // pred_check_branch
      %3074 = sbr.rel (0) target = $region49
    $region48: #{tpu_custom_call.1} parent=1 // pred_region
      _
    $region49: #{tpu_custom_call.1} parent=1 // pred_fallthru
      _
    // Predicated region
    $region50: #{tpu_custom_call.1} parent=1 // pred_check
      _
    $region51: #{tpu_custom_call.1} parent=1 // pred_check_branch
      %3076 = sbr.rel (0) target = $region53
    $region52: #{tpu_custom_call.1} parent=1 // pred_region
      _
    $region53: #{tpu_custom_call.1} parent=1 // pred_fallthru
      _
    %3077 = vsyncpa [#allocation3], 1
    %3078 = vsyncpa [#allocation5], 1
    %3079 = vsyncpa [#allocation8], 1

</llo_original>
